<compile_context>
chip_gen: v7x
topology: tpu7x:2x2x1
jax: 0.10.0
libtpu: 0.0.40
codegen_flags: <defaults>
</compile_context>

<pallas_src>
import functools
import math

import numpy as np
import jax
import jax.numpy as jnp
from jax import lax
from jax.experimental import pallas as pl
from jax.experimental.pallas import tpu as pltpu


# ----------------------------- Pallas kernel ------------------------------ #
def slayer_mlp_kernel(x_ref, w_ref, srm_ref, refx_ref, out_ref, u_scr,
                      *, theta, inv_ts, t_len):
    """Whole batch-tile per grid step, time on sublanes.

    x_ref   : (T, B*C_in)            input spikes, lane = (b, c_in)
    w_ref   : (B*C_in, B*C_out_pad)  block-diagonal dense weight (zero-padded lanes)
    srm_ref : (T, T)                 causal Toeplitz psp matrix, srm[t, t'] = k_srm[t - t']
    refx_ref: (2T, 1)                extended refractory column (zeros then kernel)
    out_ref : (T, B*C_out_pad)       output spikes, lane = (b, c_out)
    u_scr   : (T, B*C_out_pad) f32   membrane potential scratch
    """
    # --- psp before fc (exact: fc is per-timestep, psp is per-channel) -------
    z = jnp.dot(srm_ref[...], x_ref[...], preferred_element_type=jnp.float32)  # (T, B*C_in)
    # --- fc: one 2-D MXU matmul against the block-diagonal weight ------------
    u_scr[...] = jnp.dot(z, w_ref[...], preferred_element_type=jnp.float32)    # (T, B*C_out_pad)

    # --- spike: sequential threshold + refractory update over time -----------
    def body(t, carry):
        u_t = u_scr[pl.ds(t, 1), :]                           # (1, L) membrane at time t
        fired = (u_t >= theta).astype(jnp.float32)            # (1, L) in {0, 1}
        out_ref[pl.ds(t, 1), :] = fired * inv_ts              # direct lane-dense spike store
        # refractory column for a spike at time t: ref_col[tau] = k_ref[tau - t] (0 for tau < t)
        ref_col = refx_ref[pl.ds(t_len - t, t_len), :]        # (T, 1) dynamic sublane slice
        u_scr[...] = u_scr[...] + ref_col * fired             # outer-product update of future u
        return carry

    lax.fori_loop(0, t_len, body, 0, unroll=True)


# --------------------------------- wrapper --------------------------------- #
def slayer_mlp_forward(spike_input, weight, srm_kernel, ref_kernel, theta, ts,
                       b_tile=None):
    """spike_input: (N, C_in, T); weight: (C_out, C_in). Returns spikes (N, C_out, T)."""
    n, c_in, t_len = spike_input.shape
    c_out = weight.shape[0]
    if b_tile is None:
        b_tile = n                      # whole batch per grid step (amortize grid overhead)
    assert n % b_tile == 0
    n_tiles = n // b_tile

    lanes_in = b_tile * c_in
    lanes_out = b_tile * c_out
    lanes_out_pad = ((lanes_out + 127) // 128) * 128          # lane-dense output stores

    # ---- layout plumbing (outside the kernel) ----
    # x2[t, b*C_in + ci] = x[b, ci, t]  -> time on sublanes, (batch, channel) on lanes
    x2 = jnp.transpose(spike_input.astype(jnp.float32), (2, 0, 1)).reshape(t_len, n * c_in)
    # block-diagonal weight: lane groups (b, C_in) -> (b, C_out) in a single 2-D matmul;
    # zero-pad extra lanes (padded channels never cross threshold, sliced off below).
    w_blk = jnp.kron(jnp.eye(b_tile, dtype=jnp.float32), weight.astype(jnp.float32).T)
    if lanes_out_pad != lanes_out:
        w_blk = jnp.pad(w_blk, ((0, 0), (0, lanes_out_pad - lanes_out)))

    # ---- host-side filter construction ----
    srm_T = jnp.asarray(_causal_toeplitz(np.asarray(srm_kernel, np.float32), t_len))
    ref_ext = np.zeros((2 * t_len, 1), np.float32)            # [zeros(T); ref_kernel padded to T]
    rk = np.asarray(ref_kernel, np.float32)[:t_len]
    ref_ext[t_len:t_len + rk.shape[0], 0] = rk
    ref_ext[t_len, 0] = 0.0   # lag-0 tap must be 0 (alpha kernel is 0 at t=0); spike at t never self-suppresses at t
    ref_ext = jnp.asarray(ref_ext)

    kernel = functools.partial(slayer_mlp_kernel,
                               theta=float(theta), inv_ts=1.0 / float(ts), t_len=t_len)

    out2 = pl.pallas_call(
        kernel,
        out_shape=jax.ShapeDtypeStruct((t_len, n_tiles * lanes_out_pad), jnp.float32),
        grid_spec=pltpu.PrefetchScalarGridSpec(
            num_scalar_prefetch=0,
            grid=(n_tiles,),
            in_specs=[
                pl.BlockSpec((t_len, lanes_in), lambda i: (0, i)),
                pl.BlockSpec((lanes_in, lanes_out_pad), lambda i: (0, 0)),
                pl.BlockSpec((t_len, t_len), lambda i: (0, 0)),
                pl.BlockSpec((2 * t_len, 1), lambda i: (0, 0)),
            ],
            out_specs=pl.BlockSpec((t_len, lanes_out_pad), lambda i: (0, i)),
            scratch_shapes=[pltpu.VMEM((t_len, lanes_out_pad), jnp.float32)],
        ),
        compiler_params=pltpu.CompilerParams(dimension_semantics=("parallel",)),
    )(x2, w_blk, srm_T, ref_ext)

    # back to (N, C_out, T)
    out3 = out2.reshape(t_len, n_tiles, lanes_out_pad)[:, :, :lanes_out]
    out4 = out3.reshape(t_len, n, c_out)
    return jnp.transpose(out4, (1, 2, 0))


# ------------------------ SLAYER kernel construction ----------------------- #
def alpha_kernel(tau, mult, t_sample, ts, epsilon=0.01):
    """SLAYER's _calculateAlphaKernel: mult * (t/tau) * exp(1 - t/tau), truncated."""
    vals = []
    t = 0.0
    while t < t_sample:
        v = mult * t / tau * math.exp(1.0 - t / tau)
        if abs(v) < epsilon and t > tau:
            break
        vals.append(v)
        t += ts
    return np.asarray(vals, dtype=np.float32)


def _causal_toeplitz(kern, t_len):
    """M[t, t'] = kern[t - t'] for 0 <= t - t' < len(kern), else 0 (causal FIR as matmul)."""
    m = np.zeros((t_len, t_len), dtype=np.float32)
    for i, v in enumerate(kern[:t_len]):
        idx = np.arange(t_len - i)
        m[idx + i, idx] = v
    return m


# ---------------------------------- main ----------------------------------- #
if __name__ == "__main__":
    # Small synthetic SLAYER configuration.
    N, C_IN, C_OUT, T = 2, 24, 32, 32
    params = {
        "neuron": {"theta": 0.25, "tauSr": 2.0, "tauRef": 2.0, "scaleRef": 2.0},
        "simulation": {"Ts": 1.0, "tSample": T},
    }
    theta = params["neuron"]["theta"]
    ts = params["simulation"]["Ts"]

    # Deterministic parameters / inputs.
    key = jax.random.PRNGKey(0)
    k_x, k_w = jax.random.split(key)
    # binary spike train, amplitude 1/Ts
    spike_input = (jax.random.uniform(k_x, (N, C_IN, T)) < 0.3).astype(jnp.float32) * (1.0 / ts)
    # dense weight (SLAYER dense = Conv3d(C_in, C_out, 1) without bias; weightScale folded in)
    weight = (jax.random.normal(k_w, (C_OUT, C_IN), dtype=jnp.float32) * 0.3).astype(jnp.float32)

    srm = alpha_kernel(params["neuron"]["tauSr"], 1.0, T, ts)                   # psp kernel
    ref = alpha_kernel(params["neuron"]["tauRef"],
                       -params["neuron"]["scaleRef"] * theta, T, ts)            # refractory kernel

    out = slayer_mlp_forward(spike_input, weight, srm, ref, theta, ts)
    jax.block_until_ready(out)
    assert out.shape == (N, C_OUT, T) and out.dtype == jnp.float32
    print("KERNEL_OK")
</pallas_src>

<mosaic_0001>
module attributes {stable_mosaic.version = 11 : i64} {
  func.func @slayer_mlp_kernel(%arg0: i32, %arg1: memref<32x48xf32, #tpu.memory_space<vmem>>, %arg2: memref<48x128xf32, #tpu.memory_space<vmem>>, %arg3: memref<32x32xf32, #tpu.memory_space<vmem>>, %arg4: memref<64x1xf32, #tpu.memory_space<vmem>>, %arg5: memref<32x128xf32, #tpu.memory_space<vmem>>, %arg6: memref<32x128xf32, #tpu.memory_space<vmem>>) attributes {dimension_semantics = [#tpu.dimension_semantics<parallel>], iteration_bounds = array<i64: 1>, scalar_prefetch = 0 : i64, scratch_operands = 1 : i64, tpu.core_type = #tpu.core_type<tc>, window_params = [{transform_indices = @transform_0, window_bounds = array<i64: 32, 48>}, {pipeline_mode = #tpu.pipeline_mode<synchronous>, transform_indices = @transform_1, window_bounds = array<i64: 48, 128>}, {pipeline_mode = #tpu.pipeline_mode<synchronous>, transform_indices = @transform_2, window_bounds = array<i64: 32, 32>}, {pipeline_mode = #tpu.pipeline_mode<synchronous>, transform_indices = @transform_3, window_bounds = array<i64: 64, 1>}, {transform_indices = @transform_4, window_bounds = array<i64: 32, 128>}]} {
    %c0 = arith.constant 0 : index
    %c0_0 = arith.constant 0 : index
    %0 = vector.load %arg3[%c0, %c0_0] : memref<32x32xf32, #tpu.memory_space<vmem>>, vector<32x32xf32>
    %c0_1 = arith.constant 0 : index
    %c0_2 = arith.constant 0 : index
    %1 = vector.load %arg1[%c0_1, %c0_2] : memref<32x48xf32, #tpu.memory_space<vmem>>, vector<32x48xf32>
    %cst = arith.constant dense<0.000000e+00> : vector<32x48xf32>
    %2 = tpu.matmul %0, %1, %cst {dimension_numbers = #tpu.dot_dimension_numbers<[1], [0], [0], [1], [0, 0, 1, 1], [], []>} : vector<32x32xf32>, vector<32x48xf32>, vector<32x48xf32> -> vector<32x48xf32>
    %c0_3 = arith.constant 0 : index
    %c0_4 = arith.constant 0 : index
    %3 = vector.load %arg2[%c0_3, %c0_4] : memref<48x128xf32, #tpu.memory_space<vmem>>, vector<48x128xf32>
    %cst_5 = arith.constant dense<0.000000e+00> : vector<32x128xf32>
    %4 = tpu.matmul %2, %3, %cst_5 {dimension_numbers = #tpu.dot_dimension_numbers<[1], [0], [0], [1], [0, 0, 1, 1], [], []>} : vector<32x48xf32>, vector<48x128xf32>, vector<32x128xf32> -> vector<32x128xf32>
    %c0_6 = arith.constant 0 : index
    %c0_7 = arith.constant 0 : index
    %5 = vector.load %arg6[%c0_6, %c0_7] : memref<32x128xf32, #tpu.memory_space<vmem>>, vector<32x128xf32>
    tpu.vector_store %arg6[%c0_6, %c0_7], %4 {strides = array<i32>} : memref<32x128xf32, #tpu.memory_space<vmem>>, vector<32x128xf32>,
    %c0_i32 = arith.constant 0 : i32
    %6 = arith.index_cast %c0_i32 : i32 to index
    %c0_8 = arith.constant 0 : index
    %7 = vector.load %arg6[%6, %c0_8] : memref<32x128xf32, #tpu.memory_space<vmem>>, vector<1x128xf32>
    %cst_9 = arith.constant 2.500000e-01 : f32
    %8 = vector.broadcast %cst_9 : f32 to vector<1x128xf32>
    %9 = arith.cmpf oge, %7, %8 : vector<1x128xf32>
    %10 = arith.extui %9 : vector<1x128xi1> to vector<1x128xi32>
    %11 = arith.sitofp %10 : vector<1x128xi32> to vector<1x128xf32>
    %cst_10 = arith.constant 1.000000e+00 : f32
    %12 = vector.broadcast %cst_10 : f32 to vector<1x128xf32>
    %13 = arith.mulf %11, %12 : vector<1x128xf32>
    %14 = arith.index_cast %c0_i32 : i32 to index
    %c0_11 = arith.constant 0 : index
    %15 = vector.load %arg5[%14, %c0_11] : memref<32x128xf32, #tpu.memory_space<vmem>>, vector<1x128xf32>
    tpu.vector_store %arg5[%14, %c0_11], %13 {strides = array<i32>} : memref<32x128xf32, #tpu.memory_space<vmem>>, vector<1x128xf32>,
    %c32_i32 = arith.constant 32 : i32
    %16 = arith.subi %c32_i32, %c0_i32 : i32
    %17 = arith.index_cast %16 : i32 to index
    %c0_12 = arith.constant 0 : index
    %18 = vector.load %arg4[%17, %c0_12] : memref<64x1xf32, #tpu.memory_space<vmem>>, vector<32x1xf32>
    %c0_13 = arith.constant 0 : index
    %c0_14 = arith.constant 0 : index
    %19 = vector.load %arg6[%c0_13, %c0_14] : memref<32x128xf32, #tpu.memory_space<vmem>>, vector<32x128xf32>
    %20 = vector.broadcast %18 : vector<32x1xf32> to vector<32x128xf32>
    %21 = vector.broadcast %11 : vector<1x128xf32> to vector<32x128xf32>
    %22 = arith.mulf %20, %21 : vector<32x128xf32>
    %23 = arith.addf %19, %22 : vector<32x128xf32>
    %c0_15 = arith.constant 0 : index
    %c0_16 = arith.constant 0 : index
    %24 = vector.load %arg6[%c0_15, %c0_16] : memref<32x128xf32, #tpu.memory_space<vmem>>, vector<32x128xf32>
    tpu.vector_store %arg6[%c0_15, %c0_16], %23 {strides = array<i32>} : memref<32x128xf32, #tpu.memory_space<vmem>>, vector<32x128xf32>,
    %c1_i32 = arith.constant 1 : i32
    %25 = arith.index_cast %c1_i32 : i32 to index
    %c0_17 = arith.constant 0 : index
    %26 = vector.load %arg6[%25, %c0_17] : memref<32x128xf32, #tpu.memory_space<vmem>>, vector<1x128xf32>
    %cst_18 = arith.constant 2.500000e-01 : f32
    %27 = vector.broadcast %cst_18 : f32 to vector<1x128xf32>
    %28 = arith.cmpf oge, %26, %27 : vector<1x128xf32>
    %29 = arith.extui %28 : vector<1x128xi1> to vector<1x128xi32>
    %30 = arith.sitofp %29 : vector<1x128xi32> to vector<1x128xf32>
    %cst_19 = arith.constant 1.000000e+00 : f32
    %31 = vector.broadcast %cst_19 : f32 to vector<1x128xf32>
    %32 = arith.mulf %30, %31 : vector<1x128xf32>
    %33 = arith.index_cast %c1_i32 : i32 to index
    %c0_20 = arith.constant 0 : index
    %34 = vector.load %arg5[%33, %c0_20] : memref<32x128xf32, #tpu.memory_space<vmem>>, vector<1x128xf32>
    tpu.vector_store %arg5[%33, %c0_20], %32 {strides = array<i32>} : memref<32x128xf32, #tpu.memory_space<vmem>>, vector<1x128xf32>,
    %c32_i32_21 = arith.constant 32 : i32
    %35 = arith.subi %c32_i32_21, %c1_i32 : i32
    %36 = arith.index_cast %35 : i32 to index
    %c0_22 = arith.constant 0 : index
    %37 = vector.load %arg4[%36, %c0_22] : memref<64x1xf32, #tpu.memory_space<vmem>>, vector<32x1xf32>
    %c0_23 = arith.constant 0 : index
    %c0_24 = arith.constant 0 : index
    %38 = vector.load %arg6[%c0_23, %c0_24] : memref<32x128xf32, #tpu.memory_space<vmem>>, vector<32x128xf32>
    %39 = vector.broadcast %37 : vector<32x1xf32> to vector<32x128xf32>
    %40 = vector.broadcast %30 : vector<1x128xf32> to vector<32x128xf32>
    %41 = arith.mulf %39, %40 : vector<32x128xf32>
    %42 = arith.addf %38, %41 : vector<32x128xf32>
    %c0_25 = arith.constant 0 : index
    %c0_26 = arith.constant 0 : index
    %43 = vector.load %arg6[%c0_25, %c0_26] : memref<32x128xf32, #tpu.memory_space<vmem>>, vector<32x128xf32>
    tpu.vector_store %arg6[%c0_25, %c0_26], %42 {strides = array<i32>} : memref<32x128xf32, #tpu.memory_space<vmem>>, vector<32x128xf32>,
    %c2_i32 = arith.constant 2 : i32
    %44 = arith.index_cast %c2_i32 : i32 to index
    %c0_27 = arith.constant 0 : index
    %45 = vector.load %arg6[%44, %c0_27] : memref<32x128xf32, #tpu.memory_space<vmem>>, vector<1x128xf32>
    %cst_28 = arith.constant 2.500000e-01 : f32
    %46 = vector.broadcast %cst_28 : f32 to vector<1x128xf32>
    %47 = arith.cmpf oge, %45, %46 : vector<1x128xf32>
    %48 = arith.extui %47 : vector<1x128xi1> to vector<1x128xi32>
    %49 = arith.sitofp %48 : vector<1x128xi32> to vector<1x128xf32>
    %cst_29 = arith.constant 1.000000e+00 : f32
    %50 = vector.broadcast %cst_29 : f32 to vector<1x128xf32>
    %51 = arith.mulf %49, %50 : vector<1x128xf32>
    %52 = arith.index_cast %c2_i32 : i32 to index
    %c0_30 = arith.constant 0 : index
    %53 = vector.load %arg5[%52, %c0_30] : memref<32x128xf32, #tpu.memory_space<vmem>>, vector<1x128xf32>
    tpu.vector_store %arg5[%52, %c0_30], %51 {strides = array<i32>} : memref<32x128xf32, #tpu.memory_space<vmem>>, vector<1x128xf32>,
    %c32_i32_31 = arith.constant 32 : i32
    %54 = arith.subi %c32_i32_31, %c2_i32 : i32
    %55 = arith.index_cast %54 : i32 to index
    %c0_32 = arith.constant 0 : index
    %56 = vector.load %arg4[%55, %c0_32] : memref<64x1xf32, #tpu.memory_space<vmem>>, vector<32x1xf32>
    %c0_33 = arith.constant 0 : index
    %c0_34 = arith.constant 0 : index
    %57 = vector.load %arg6[%c0_33, %c0_34] : memref<32x128xf32, #tpu.memory_space<vmem>>, vector<32x128xf32>
    %58 = vector.broadcast %56 : vector<32x1xf32> to vector<32x128xf32>
    %59 = vector.broadcast %49 : vector<1x128xf32> to vector<32x128xf32>
    %60 = arith.mulf %58, %59 : vector<32x128xf32>
    %61 = arith.addf %57, %60 : vector<32x128xf32>
    %c0_35 = arith.constant 0 : index
    %c0_36 = arith.constant 0 : index
    %62 = vector.load %arg6[%c0_35, %c0_36] : memref<32x128xf32, #tpu.memory_space<vmem>>, vector<32x128xf32>
    tpu.vector_store %arg6[%c0_35, %c0_36], %61 {strides = array<i32>} : memref<32x128xf32, #tpu.memory_space<vmem>>, vector<32x128xf32>,
    %c3_i32 = arith.constant 3 : i32
    %63 = arith.index_cast %c3_i32 : i32 to index
    %c0_37 = arith.constant 0 : index
    %64 = vector.load %arg6[%63, %c0_37] : memref<32x128xf32, #tpu.memory_space<vmem>>, vector<1x128xf32>
    %cst_38 = arith.constant 2.500000e-01 : f32
    %65 = vector.broadcast %cst_38 : f32 to vector<1x128xf32>
    %66 = arith.cmpf oge, %64, %65 : vector<1x128xf32>
    %67 = arith.extui %66 : vector<1x128xi1> to vector<1x128xi32>
    %68 = arith.sitofp %67 : vector<1x128xi32> to vector<1x128xf32>
    %cst_39 = arith.constant 1.000000e+00 : f32
    %69 = vector.broadcast %cst_39 : f32 to vector<1x128xf32>
    %70 = arith.mulf %68, %69 : vector<1x128xf32>
    %71 = arith.index_cast %c3_i32 : i32 to index
    %c0_40 = arith.constant 0 : index
    %72 = vector.load %arg5[%71, %c0_40] : memref<32x128xf32, #tpu.memory_space<vmem>>, vector<1x128xf32>
    tpu.vector_store %arg5[%71, %c0_40], %70 {strides = array<i32>} : memref<32x128xf32, #tpu.memory_space<vmem>>, vector<1x128xf32>,
    %c32_i32_41 = arith.constant 32 : i32
    %73 = arith.subi %c32_i32_41, %c3_i32 : i32
    %74 = arith.index_cast %73 : i32 to index
    %c0_42 = arith.constant 0 : index
    %75 = vector.load %arg4[%74, %c0_42] : memref<64x1xf32, #tpu.memory_space<vmem>>, vector<32x1xf32>
    %c0_43 = arith.constant 0 : index
    %c0_44 = arith.constant 0 : index
    %76 = vector.load %arg6[%c0_43, %c0_44] : memref<32x128xf32, #tpu.memory_space<vmem>>, vector<32x128xf32>
    %77 = vector.broadcast %75 : vector<32x1xf32> to vector<32x128xf32>
    %78 = vector.broadcast %68 : vector<1x128xf32> to vector<32x128xf32>
    %79 = arith.mulf %77, %78 : vector<32x128xf32>
    %80 = arith.addf %76, %79 : vector<32x128xf32>
    %c0_45 = arith.constant 0 : index
    %c0_46 = arith.constant 0 : index
    %81 = vector.load %arg6[%c0_45, %c0_46] : memref<32x128xf32, #tpu.memory_space<vmem>>, vector<32x128xf32>
    tpu.vector_store %arg6[%c0_45, %c0_46], %80 {strides = array<i32>} : memref<32x128xf32, #tpu.memory_space<vmem>>, vector<32x128xf32>,
    %c4_i32 = arith.constant 4 : i32
    %82 = arith.index_cast %c4_i32 : i32 to index
    %c0_47 = arith.constant 0 : index
    %83 = vector.load %arg6[%82, %c0_47] : memref<32x128xf32, #tpu.memory_space<vmem>>, vector<1x128xf32>
    %cst_48 = arith.constant 2.500000e-01 : f32
    %84 = vector.broadcast %cst_48 : f32 to vector<1x128xf32>
    %85 = arith.cmpf oge, %83, %84 : vector<1x128xf32>
    %86 = arith.extui %85 : vector<1x128xi1> to vector<1x128xi32>
    %87 = arith.sitofp %86 : vector<1x128xi32> to vector<1x128xf32>
    %cst_49 = arith.constant 1.000000e+00 : f32
    %88 = vector.broadcast %cst_49 : f32 to vector<1x128xf32>
    %89 = arith.mulf %87, %88 : vector<1x128xf32>
    %90 = arith.index_cast %c4_i32 : i32 to index
    %c0_50 = arith.constant 0 : index
    %91 = vector.load %arg5[%90, %c0_50] : memref<32x128xf32, #tpu.memory_space<vmem>>, vector<1x128xf32>
    tpu.vector_store %arg5[%90, %c0_50], %89 {strides = array<i32>} : memref<32x128xf32, #tpu.memory_space<vmem>>, vector<1x128xf32>,
    %c32_i32_51 = arith.constant 32 : i32
    %92 = arith.subi %c32_i32_51, %c4_i32 : i32
    %93 = arith.index_cast %92 : i32 to index
    %c0_52 = arith.constant 0 : index
    %94 = vector.load %arg4[%93, %c0_52] : memref<64x1xf32, #tpu.memory_space<vmem>>, vector<32x1xf32>
    %c0_53 = arith.constant 0 : index
    %c0_54 = arith.constant 0 : index
    %95 = vector.load %arg6[%c0_53, %c0_54] : memref<32x128xf32, #tpu.memory_space<vmem>>, vector<32x128xf32>
    %96 = vector.broadcast %94 : vector<32x1xf32> to vector<32x128xf32>
    %97 = vector.broadcast %87 : vector<1x128xf32> to vector<32x128xf32>
    %98 = arith.mulf %96, %97 : vector<32x128xf32>
    %99 = arith.addf %95, %98 : vector<32x128xf32>
    %c0_55 = arith.constant 0 : index
    %c0_56 = arith.constant 0 : index
    %100 = vector.load %arg6[%c0_55, %c0_56] : memref<32x128xf32, #tpu.memory_space<vmem>>, vector<32x128xf32>
    tpu.vector_store %arg6[%c0_55, %c0_56], %99 {strides = array<i32>} : memref<32x128xf32, #tpu.memory_space<vmem>>, vector<32x128xf32>,
    %c5_i32 = arith.constant 5 : i32
    %101 = arith.index_cast %c5_i32 : i32 to index
    %c0_57 = arith.constant 0 : index
    %102 = vector.load %arg6[%101, %c0_57] : memref<32x128xf32, #tpu.memory_space<vmem>>, vector<1x128xf32>
    %cst_58 = arith.constant 2.500000e-01 : f32
    %103 = vector.broadcast %cst_58 : f32 to vector<1x128xf32>
    %104 = arith.cmpf oge, %102, %103 : vector<1x128xf32>
    %105 = arith.extui %104 : vector<1x128xi1> to vector<1x128xi32>
    %106 = arith.sitofp %105 : vector<1x128xi32> to vector<1x128xf32>
    %cst_59 = arith.constant 1.000000e+00 : f32
    %107 = vector.broadcast %cst_59 : f32 to vector<1x128xf32>
    %108 = arith.mulf %106, %107 : vector<1x128xf32>
    %109 = arith.index_cast %c5_i32 : i32 to index
    %c0_60 = arith.constant 0 : index
    %110 = vector.load %arg5[%109, %c0_60] : memref<32x128xf32, #tpu.memory_space<vmem>>, vector<1x128xf32>
    tpu.vector_store %arg5[%109, %c0_60], %108 {strides = array<i32>} : memref<32x128xf32, #tpu.memory_space<vmem>>, vector<1x128xf32>,
    %c32_i32_61 = arith.constant 32 : i32
    %111 = arith.subi %c32_i32_61, %c5_i32 : i32
    %112 = arith.index_cast %111 : i32 to index
    %c0_62 = arith.constant 0 : index
    %113 = vector.load %arg4[%112, %c0_62] : memref<64x1xf32, #tpu.memory_space<vmem>>, vector<32x1xf32>
    %c0_63 = arith.constant 0 : index
    %c0_64 = arith.constant 0 : index
    %114 = vector.load %arg6[%c0_63, %c0_64] : memref<32x128xf32, #tpu.memory_space<vmem>>, vector<32x128xf32>
    %115 = vector.broadcast %113 : vector<32x1xf32> to vector<32x128xf32>
    %116 = vector.broadcast %106 : vector<1x128xf32> to vector<32x128xf32>
    %117 = arith.mulf %115, %116 : vector<32x128xf32>
    %118 = arith.addf %114, %117 : vector<32x128xf32>
    %c0_65 = arith.constant 0 : index
    %c0_66 = arith.constant 0 : index
    %119 = vector.load %arg6[%c0_65, %c0_66] : memref<32x128xf32, #tpu.memory_space<vmem>>, vector<32x128xf32>
    tpu.vector_store %arg6[%c0_65, %c0_66], %118 {strides = array<i32>} : memref<32x128xf32, #tpu.memory_space<vmem>>, vector<32x128xf32>,
    %c6_i32 = arith.constant 6 : i32
    %120 = arith.index_cast %c6_i32 : i32 to index
    %c0_67 = arith.constant 0 : index
    %121 = vector.load %arg6[%120, %c0_67] : memref<32x128xf32, #tpu.memory_space<vmem>>, vector<1x128xf32>
    %cst_68 = arith.constant 2.500000e-01 : f32
    %122 = vector.broadcast %cst_68 : f32 to vector<1x128xf32>
    %123 = arith.cmpf oge, %121, %122 : vector<1x128xf32>
    %124 = arith.extui %123 : vector<1x128xi1> to vector<1x128xi32>
    %125 = arith.sitofp %124 : vector<1x128xi32> to vector<1x128xf32>
    %cst_69 = arith.constant 1.000000e+00 : f32
    %126 = vector.broadcast %cst_69 : f32 to vector<1x128xf32>
    %127 = arith.mulf %125, %126 : vector<1x128xf32>
    %128 = arith.index_cast %c6_i32 : i32 to index
    %c0_70 = arith.constant 0 : index
    %129 = vector.load %arg5[%128, %c0_70] : memref<32x128xf32, #tpu.memory_space<vmem>>, vector<1x128xf32>
    tpu.vector_store %arg5[%128, %c0_70], %127 {strides = array<i32>} : memref<32x128xf32, #tpu.memory_space<vmem>>, vector<1x128xf32>,
    %c32_i32_71 = arith.constant 32 : i32
    %130 = arith.subi %c32_i32_71, %c6_i32 : i32
    %131 = arith.index_cast %130 : i32 to index
    %c0_72 = arith.constant 0 : index
    %132 = vector.load %arg4[%131, %c0_72] : memref<64x1xf32, #tpu.memory_space<vmem>>, vector<32x1xf32>
    %c0_73 = arith.constant 0 : index
    %c0_74 = arith.constant 0 : index
    %133 = vector.load %arg6[%c0_73, %c0_74] : memref<32x128xf32, #tpu.memory_space<vmem>>, vector<32x128xf32>
    %134 = vector.broadcast %132 : vector<32x1xf32> to vector<32x128xf32>
    %135 = vector.broadcast %125 : vector<1x128xf32> to vector<32x128xf32>
    %136 = arith.mulf %134, %135 : vector<32x128xf32>
    %137 = arith.addf %133, %136 : vector<32x128xf32>
    %c0_75 = arith.constant 0 : index
    %c0_76 = arith.constant 0 : index
    %138 = vector.load %arg6[%c0_75, %c0_76] : memref<32x128xf32, #tpu.memory_space<vmem>>, vector<32x128xf32>
    tpu.vector_store %arg6[%c0_75, %c0_76], %137 {strides = array<i32>} : memref<32x128xf32, #tpu.memory_space<vmem>>, vector<32x128xf32>,
    %c7_i32 = arith.constant 7 : i32
    %139 = arith.index_cast %c7_i32 : i32 to index
    %c0_77 = arith.constant 0 : index
    %140 = vector.load %arg6[%139, %c0_77] : memref<32x128xf32, #tpu.memory_space<vmem>>, vector<1x128xf32>
    %cst_78 = arith.constant 2.500000e-01 : f32
    %141 = vector.broadcast %cst_78 : f32 to vector<1x128xf32>
    %142 = arith.cmpf oge, %140, %141 : vector<1x128xf32>
    %143 = arith.extui %142 : vector<1x128xi1> to vector<1x128xi32>
    %144 = arith.sitofp %143 : vector<1x128xi32> to vector<1x128xf32>
    %cst_79 = arith.constant 1.000000e+00 : f32
    %145 = vector.broadcast %cst_79 : f32 to vector<1x128xf32>
    %146 = arith.mulf %144, %145 : vector<1x128xf32>
    %147 = arith.index_cast %c7_i32 : i32 to index
    %c0_80 = arith.constant 0 : index
    %148 = vector.load %arg5[%147, %c0_80] : memref<32x128xf32, #tpu.memory_space<vmem>>, vector<1x128xf32>
    tpu.vector_store %arg5[%147, %c0_80], %146 {strides = array<i32>} : memref<32x128xf32, #tpu.memory_space<vmem>>, vector<1x128xf32>,
    %c32_i32_81 = arith.constant 32 : i32
    %149 = arith.subi %c32_i32_81, %c7_i32 : i32
    %150 = arith.index_cast %149 : i32 to index
    %c0_82 = arith.constant 0 : index
    %151 = vector.load %arg4[%150, %c0_82] : memref<64x1xf32, #tpu.memory_space<vmem>>, vector<32x1xf32>
    %c0_83 = arith.constant 0 : index
    %c0_84 = arith.constant 0 : index
    %152 = vector.load %arg6[%c0_83, %c0_84] : memref<32x128xf32, #tpu.memory_space<vmem>>, vector<32x128xf32>
    %153 = vector.broadcast %151 : vector<32x1xf32> to vector<32x128xf32>
    %154 = vector.broadcast %144 : vector<1x128xf32> to vector<32x128xf32>
    %155 = arith.mulf %153, %154 : vector<32x128xf32>
    %156 = arith.addf %152, %155 : vector<32x128xf32>
    %c0_85 = arith.constant 0 : index
    %c0_86 = arith.constant 0 : index
    %157 = vector.load %arg6[%c0_85, %c0_86] : memref<32x128xf32, #tpu.memory_space<vmem>>, vector<32x128xf32>
    tpu.vector_store %arg6[%c0_85, %c0_86], %156 {strides = array<i32>} : memref<32x128xf32, #tpu.memory_space<vmem>>, vector<32x128xf32>,
    %c8_i32 = arith.constant 8 : i32
    %158 = arith.index_cast %c8_i32 : i32 to index
    %c0_87 = arith.constant 0 : index
    %159 = vector.load %arg6[%158, %c0_87] : memref<32x128xf32, #tpu.memory_space<vmem>>, vector<1x128xf32>
    %cst_88 = arith.constant 2.500000e-01 : f32
    %160 = vector.broadcast %cst_88 : f32 to vector<1x128xf32>
    %161 = arith.cmpf oge, %159, %160 : vector<1x128xf32>
    %162 = arith.extui %161 : vector<1x128xi1> to vector<1x128xi32>
    %163 = arith.sitofp %162 : vector<1x128xi32> to vector<1x128xf32>
    %cst_89 = arith.constant 1.000000e+00 : f32
    %164 = vector.broadcast %cst_89 : f32 to vector<1x128xf32>
    %165 = arith.mulf %163, %164 : vector<1x128xf32>
    %166 = arith.index_cast %c8_i32 : i32 to index
    %c0_90 = arith.constant 0 : index
    %167 = vector.load %arg5[%166, %c0_90] : memref<32x128xf32, #tpu.memory_space<vmem>>, vector<1x128xf32>
    tpu.vector_store %arg5[%166, %c0_90], %165 {strides = array<i32>} : memref<32x128xf32, #tpu.memory_space<vmem>>, vector<1x128xf32>,
    %c32_i32_91 = arith.constant 32 : i32
    %168 = arith.subi %c32_i32_91, %c8_i32 : i32
    %169 = arith.index_cast %168 : i32 to index
    %c0_92 = arith.constant 0 : index
    %170 = vector.load %arg4[%169, %c0_92] : memref<64x1xf32, #tpu.memory_space<vmem>>, vector<32x1xf32>
    %c0_93 = arith.constant 0 : index
    %c0_94 = arith.constant 0 : index
    %171 = vector.load %arg6[%c0_93, %c0_94] : memref<32x128xf32, #tpu.memory_space<vmem>>, vector<32x128xf32>
    %172 = vector.broadcast %170 : vector<32x1xf32> to vector<32x128xf32>
    %173 = vector.broadcast %163 : vector<1x128xf32> to vector<32x128xf32>
    %174 = arith.mulf %172, %173 : vector<32x128xf32>
    %175 = arith.addf %171, %174 : vector<32x128xf32>
    %c0_95 = arith.constant 0 : index
    %c0_96 = arith.constant 0 : index
    %176 = vector.load %arg6[%c0_95, %c0_96] : memref<32x128xf32, #tpu.memory_space<vmem>>, vector<32x128xf32>
    tpu.vector_store %arg6[%c0_95, %c0_96], %175 {strides = array<i32>} : memref<32x128xf32, #tpu.memory_space<vmem>>, vector<32x128xf32>,
    %c9_i32 = arith.constant 9 : i32
    %177 = arith.index_cast %c9_i32 : i32 to index
    %c0_97 = arith.constant 0 : index
    %178 = vector.load %arg6[%177, %c0_97] : memref<32x128xf32, #tpu.memory_space<vmem>>, vector<1x128xf32>
    %cst_98 = arith.constant 2.500000e-01 : f32
    %179 = vector.broadcast %cst_98 : f32 to vector<1x128xf32>
    %180 = arith.cmpf oge, %178, %179 : vector<1x128xf32>
    %181 = arith.extui %180 : vector<1x128xi1> to vector<1x128xi32>
    %182 = arith.sitofp %181 : vector<1x128xi32> to vector<1x128xf32>
    %cst_99 = arith.constant 1.000000e+00 : f32
    %183 = vector.broadcast %cst_99 : f32 to vector<1x128xf32>
    %184 = arith.mulf %182, %183 : vector<1x128xf32>
    %185 = arith.index_cast %c9_i32 : i32 to index
    %c0_100 = arith.constant 0 : index
    %186 = vector.load %arg5[%185, %c0_100] : memref<32x128xf32, #tpu.memory_space<vmem>>, vector<1x128xf32>
    tpu.vector_store %arg5[%185, %c0_100], %184 {strides = array<i32>} : memref<32x128xf32, #tpu.memory_space<vmem>>, vector<1x128xf32>,
    %c32_i32_101 = arith.constant 32 : i32
    %187 = arith.subi %c32_i32_101, %c9_i32 : i32
    %188 = arith.index_cast %187 : i32 to index
    %c0_102 = arith.constant 0 : index
    %189 = vector.load %arg4[%188, %c0_102] : memref<64x1xf32, #tpu.memory_space<vmem>>, vector<32x1xf32>
    %c0_103 = arith.constant 0 : index
    %c0_104 = arith.constant 0 : index
    %190 = vector.load %arg6[%c0_103, %c0_104] : memref<32x128xf32, #tpu.memory_space<vmem>>, vector<32x128xf32>
    %191 = vector.broadcast %189 : vector<32x1xf32> to vector<32x128xf32>
    %192 = vector.broadcast %182 : vector<1x128xf32> to vector<32x128xf32>
    %193 = arith.mulf %191, %192 : vector<32x128xf32>
    %194 = arith.addf %190, %193 : vector<32x128xf32>
    %c0_105 = arith.constant 0 : index
    %c0_106 = arith.constant 0 : index
    %195 = vector.load %arg6[%c0_105, %c0_106] : memref<32x128xf32, #tpu.memory_space<vmem>>, vector<32x128xf32>
    tpu.vector_store %arg6[%c0_105, %c0_106], %194 {strides = array<i32>} : memref<32x128xf32, #tpu.memory_space<vmem>>, vector<32x128xf32>,
    %c10_i32 = arith.constant 10 : i32
    %196 = arith.index_cast %c10_i32 : i32 to index
    %c0_107 = arith.constant 0 : index
    %197 = vector.load %arg6[%196, %c0_107] : memref<32x128xf32, #tpu.memory_space<vmem>>, vector<1x128xf32>
    %cst_108 = arith.constant 2.500000e-01 : f32
    %198 = vector.broadcast %cst_108 : f32 to vector<1x128xf32>
    %199 = arith.cmpf oge, %197, %198 : vector<1x128xf32>
    %200 = arith.extui %199 : vector<1x128xi1> to vector<1x128xi32>
    %201 = arith.sitofp %200 : vector<1x128xi32> to vector<1x128xf32>
    %cst_109 = arith.constant 1.000000e+00 : f32
    %202 = vector.broadcast %cst_109 : f32 to vector<1x128xf32>
    %203 = arith.mulf %201, %202 : vector<1x128xf32>
    %204 = arith.index_cast %c10_i32 : i32 to index
    %c0_110 = arith.constant 0 : index
    %205 = vector.load %arg5[%204, %c0_110] : memref<32x128xf32, #tpu.memory_space<vmem>>, vector<1x128xf32>
    tpu.vector_store %arg5[%204, %c0_110], %203 {strides = array<i32>} : memref<32x128xf32, #tpu.memory_space<vmem>>, vector<1x128xf32>,
    %c32_i32_111 = arith.constant 32 : i32
    %206 = arith.subi %c32_i32_111, %c10_i32 : i32
    %207 = arith.index_cast %206 : i32 to index
    %c0_112 = arith.constant 0 : index
    %208 = vector.load %arg4[%207, %c0_112] : memref<64x1xf32, #tpu.memory_space<vmem>>, vector<32x1xf32>
    %c0_113 = arith.constant 0 : index
    %c0_114 = arith.constant 0 : index
    %209 = vector.load %arg6[%c0_113, %c0_114] : memref<32x128xf32, #tpu.memory_space<vmem>>, vector<32x128xf32>
    %210 = vector.broadcast %208 : vector<32x1xf32> to vector<32x128xf32>
    %211 = vector.broadcast %201 : vector<1x128xf32> to vector<32x128xf32>
    %212 = arith.mulf %210, %211 : vector<32x128xf32>
    %213 = arith.addf %209, %212 : vector<32x128xf32>
    %c0_115 = arith.constant 0 : index
    %c0_116 = arith.constant 0 : index
    %214 = vector.load %arg6[%c0_115, %c0_116] : memref<32x128xf32, #tpu.memory_space<vmem>>, vector<32x128xf32>
    tpu.vector_store %arg6[%c0_115, %c0_116], %213 {strides = array<i32>} : memref<32x128xf32, #tpu.memory_space<vmem>>, vector<32x128xf32>,
    %c11_i32 = arith.constant 11 : i32
    %215 = arith.index_cast %c11_i32 : i32 to index
    %c0_117 = arith.constant 0 : index
    %216 = vector.load %arg6[%215, %c0_117] : memref<32x128xf32, #tpu.memory_space<vmem>>, vector<1x128xf32>
    %cst_118 = arith.constant 2.500000e-01 : f32
    %217 = vector.broadcast %cst_118 : f32 to vector<1x128xf32>
    %218 = arith.cmpf oge, %216, %217 : vector<1x128xf32>
    %219 = arith.extui %218 : vector<1x128xi1> to vector<1x128xi32>
    %220 = arith.sitofp %219 : vector<1x128xi32> to vector<1x128xf32>
    %cst_119 = arith.constant 1.000000e+00 : f32
    %221 = vector.broadcast %cst_119 : f32 to vector<1x128xf32>
    %222 = arith.mulf %220, %221 : vector<1x128xf32>
    %223 = arith.index_cast %c11_i32 : i32 to index
    %c0_120 = arith.constant 0 : index
    %224 = vector.load %arg5[%223, %c0_120] : memref<32x128xf32, #tpu.memory_space<vmem>>, vector<1x128xf32>
    tpu.vector_store %arg5[%223, %c0_120], %222 {strides = array<i32>} : memref<32x128xf32, #tpu.memory_space<vmem>>, vector<1x128xf32>,
    %c32_i32_121 = arith.constant 32 : i32
    %225 = arith.subi %c32_i32_121, %c11_i32 : i32
    %226 = arith.index_cast %225 : i32 to index
    %c0_122 = arith.constant 0 : index
    %227 = vector.load %arg4[%226, %c0_122] : memref<64x1xf32, #tpu.memory_space<vmem>>, vector<32x1xf32>
    %c0_123 = arith.constant 0 : index
    %c0_124 = arith.constant 0 : index
    %228 = vector.load %arg6[%c0_123, %c0_124] : memref<32x128xf32, #tpu.memory_space<vmem>>, vector<32x128xf32>
    %229 = vector.broadcast %227 : vector<32x1xf32> to vector<32x128xf32>
    %230 = vector.broadcast %220 : vector<1x128xf32> to vector<32x128xf32>
    %231 = arith.mulf %229, %230 : vector<32x128xf32>
    %232 = arith.addf %228, %231 : vector<32x128xf32>
    %c0_125 = arith.constant 0 : index
    %c0_126 = arith.constant 0 : index
    %233 = vector.load %arg6[%c0_125, %c0_126] : memref<32x128xf32, #tpu.memory_space<vmem>>, vector<32x128xf32>
    tpu.vector_store %arg6[%c0_125, %c0_126], %232 {strides = array<i32>} : memref<32x128xf32, #tpu.memory_space<vmem>>, vector<32x128xf32>,
    %c12_i32 = arith.constant 12 : i32
    %234 = arith.index_cast %c12_i32 : i32 to index
    %c0_127 = arith.constant 0 : index
    %235 = vector.load %arg6[%234, %c0_127] : memref<32x128xf32, #tpu.memory_space<vmem>>, vector<1x128xf32>
    %cst_128 = arith.constant 2.500000e-01 : f32
    %236 = vector.broadcast %cst_128 : f32 to vector<1x128xf32>
    %237 = arith.cmpf oge, %235, %236 : vector<1x128xf32>
    %238 = arith.extui %237 : vector<1x128xi1> to vector<1x128xi32>
    %239 = arith.sitofp %238 : vector<1x128xi32> to vector<1x128xf32>
    %cst_129 = arith.constant 1.000000e+00 : f32
    %240 = vector.broadcast %cst_129 : f32 to vector<1x128xf32>
    %241 = arith.mulf %239, %240 : vector<1x128xf32>
    %242 = arith.index_cast %c12_i32 : i32 to index
    %c0_130 = arith.constant 0 : index
    %243 = vector.load %arg5[%242, %c0_130] : memref<32x128xf32, #tpu.memory_space<vmem>>, vector<1x128xf32>
    tpu.vector_store %arg5[%242, %c0_130], %241 {strides = array<i32>} : memref<32x128xf32, #tpu.memory_space<vmem>>, vector<1x128xf32>,
    %c32_i32_131 = arith.constant 32 : i32
    %244 = arith.subi %c32_i32_131, %c12_i32 : i32
    %245 = arith.index_cast %244 : i32 to index
    %c0_132 = arith.constant 0 : index
    %246 = vector.load %arg4[%245, %c0_132] : memref<64x1xf32, #tpu.memory_space<vmem>>, vector<32x1xf32>
    %c0_133 = arith.constant 0 : index
    %c0_134 = arith.constant 0 : index
    %247 = vector.load %arg6[%c0_133, %c0_134] : memref<32x128xf32, #tpu.memory_space<vmem>>, vector<32x128xf32>
    %248 = vector.broadcast %246 : vector<32x1xf32> to vector<32x128xf32>
    %249 = vector.broadcast %239 : vector<1x128xf32> to vector<32x128xf32>
    %250 = arith.mulf %248, %249 : vector<32x128xf32>
    %251 = arith.addf %247, %250 : vector<32x128xf32>
    %c0_135 = arith.constant 0 : index
    %c0_136 = arith.constant 0 : index
    %252 = vector.load %arg6[%c0_135, %c0_136] : memref<32x128xf32, #tpu.memory_space<vmem>>, vector<32x128xf32>
    tpu.vector_store %arg6[%c0_135, %c0_136], %251 {strides = array<i32>} : memref<32x128xf32, #tpu.memory_space<vmem>>, vector<32x128xf32>,
    %c13_i32 = arith.constant 13 : i32
    %253 = arith.index_cast %c13_i32 : i32 to index
    %c0_137 = arith.constant 0 : index
    %254 = vector.load %arg6[%253, %c0_137] : memref<32x128xf32, #tpu.memory_space<vmem>>, vector<1x128xf32>
    %cst_138 = arith.constant 2.500000e-01 : f32
    %255 = vector.broadcast %cst_138 : f32 to vector<1x128xf32>
    %256 = arith.cmpf oge, %254, %255 : vector<1x128xf32>
    %257 = arith.extui %256 : vector<1x128xi1> to vector<1x128xi32>
    %258 = arith.sitofp %257 : vector<1x128xi32> to vector<1x128xf32>
    %cst_139 = arith.constant 1.000000e+00 : f32
    %259 = vector.broadcast %cst_139 : f32 to vector<1x128xf32>
    %260 = arith.mulf %258, %259 : vector<1x128xf32>
    %261 = arith.index_cast %c13_i32 : i32 to index
    %c0_140 = arith.constant 0 : index
    %262 = vector.load %arg5[%261, %c0_140] : memref<32x128xf32, #tpu.memory_space<vmem>>, vector<1x128xf32>
    tpu.vector_store %arg5[%261, %c0_140], %260 {strides = array<i32>} : memref<32x128xf32, #tpu.memory_space<vmem>>, vector<1x128xf32>,
    %c32_i32_141 = arith.constant 32 : i32
    %263 = arith.subi %c32_i32_141, %c13_i32 : i32
    %264 = arith.index_cast %263 : i32 to index
    %c0_142 = arith.constant 0 : index
    %265 = vector.load %arg4[%264, %c0_142] : memref<64x1xf32, #tpu.memory_space<vmem>>, vector<32x1xf32>
    %c0_143 = arith.constant 0 : index
    %c0_144 = arith.constant 0 : index
    %266 = vector.load %arg6[%c0_143, %c0_144] : memref<32x128xf32, #tpu.memory_space<vmem>>, vector<32x128xf32>
    %267 = vector.broadcast %265 : vector<32x1xf32> to vector<32x128xf32>
    %268 = vector.broadcast %258 : vector<1x128xf32> to vector<32x128xf32>
    %269 = arith.mulf %267, %268 : vector<32x128xf32>
    %270 = arith.addf %266, %269 : vector<32x128xf32>
    %c0_145 = arith.constant 0 : index
    %c0_146 = arith.constant 0 : index
    %271 = vector.load %arg6[%c0_145, %c0_146] : memref<32x128xf32, #tpu.memory_space<vmem>>, vector<32x128xf32>
    tpu.vector_store %arg6[%c0_145, %c0_146], %270 {strides = array<i32>} : memref<32x128xf32, #tpu.memory_space<vmem>>, vector<32x128xf32>,
    %c14_i32 = arith.constant 14 : i32
    %272 = arith.index_cast %c14_i32 : i32 to index
    %c0_147 = arith.constant 0 : index
    %273 = vector.load %arg6[%272, %c0_147] : memref<32x128xf32, #tpu.memory_space<vmem>>, vector<1x128xf32>
    %cst_148 = arith.constant 2.500000e-01 : f32
    %274 = vector.broadcast %cst_148 : f32 to vector<1x128xf32>
    %275 = arith.cmpf oge, %273, %274 : vector<1x128xf32>
    %276 = arith.extui %275 : vector<1x128xi1> to vector<1x128xi32>
    %277 = arith.sitofp %276 : vector<1x128xi32> to vector<1x128xf32>
    %cst_149 = arith.constant 1.000000e+00 : f32
    %278 = vector.broadcast %cst_149 : f32 to vector<1x128xf32>
    %279 = arith.mulf %277, %278 : vector<1x128xf32>
    %280 = arith.index_cast %c14_i32 : i32 to index
    %c0_150 = arith.constant 0 : index
    %281 = vector.load %arg5[%280, %c0_150] : memref<32x128xf32, #tpu.memory_space<vmem>>, vector<1x128xf32>
    tpu.vector_store %arg5[%280, %c0_150], %279 {strides = array<i32>} : memref<32x128xf32, #tpu.memory_space<vmem>>, vector<1x128xf32>,
    %c32_i32_151 = arith.constant 32 : i32
    %282 = arith.subi %c32_i32_151, %c14_i32 : i32
    %283 = arith.index_cast %282 : i32 to index
    %c0_152 = arith.constant 0 : index
    %284 = vector.load %arg4[%283, %c0_152] : memref<64x1xf32, #tpu.memory_space<vmem>>, vector<32x1xf32>
    %c0_153 = arith.constant 0 : index
    %c0_154 = arith.constant 0 : index
    %285 = vector.load %arg6[%c0_153, %c0_154] : memref<32x128xf32, #tpu.memory_space<vmem>>, vector<32x128xf32>
    %286 = vector.broadcast %284 : vector<32x1xf32> to vector<32x128xf32>
    %287 = vector.broadcast %277 : vector<1x128xf32> to vector<32x128xf32>
    %288 = arith.mulf %286, %287 : vector<32x128xf32>
    %289 = arith.addf %285, %288 : vector<32x128xf32>
    %c0_155 = arith.constant 0 : index
    %c0_156 = arith.constant 0 : index
    %290 = vector.load %arg6[%c0_155, %c0_156] : memref<32x128xf32, #tpu.memory_space<vmem>>, vector<32x128xf32>
    tpu.vector_store %arg6[%c0_155, %c0_156], %289 {strides = array<i32>} : memref<32x128xf32, #tpu.memory_space<vmem>>, vector<32x128xf32>,
    %c15_i32 = arith.constant 15 : i32
    %291 = arith.index_cast %c15_i32 : i32 to index
    %c0_157 = arith.constant 0 : index
    %292 = vector.load %arg6[%291, %c0_157] : memref<32x128xf32, #tpu.memory_space<vmem>>, vector<1x128xf32>
    %cst_158 = arith.constant 2.500000e-01 : f32
    %293 = vector.broadcast %cst_158 : f32 to vector<1x128xf32>
    %294 = arith.cmpf oge, %292, %293 : vector<1x128xf32>
    %295 = arith.extui %294 : vector<1x128xi1> to vector<1x128xi32>
    %296 = arith.sitofp %295 : vector<1x128xi32> to vector<1x128xf32>
    %cst_159 = arith.constant 1.000000e+00 : f32
    %297 = vector.broadcast %cst_159 : f32 to vector<1x128xf32>
    %298 = arith.mulf %296, %297 : vector<1x128xf32>
    %299 = arith.index_cast %c15_i32 : i32 to index
    %c0_160 = arith.constant 0 : index
    %300 = vector.load %arg5[%299, %c0_160] : memref<32x128xf32, #tpu.memory_space<vmem>>, vector<1x128xf32>
    tpu.vector_store %arg5[%299, %c0_160], %298 {strides = array<i32>} : memref<32x128xf32, #tpu.memory_space<vmem>>, vector<1x128xf32>,
    %c32_i32_161 = arith.constant 32 : i32
    %301 = arith.subi %c32_i32_161, %c15_i32 : i32
    %302 = arith.index_cast %301 : i32 to index
    %c0_162 = arith.constant 0 : index
    %303 = vector.load %arg4[%302, %c0_162] : memref<64x1xf32, #tpu.memory_space<vmem>>, vector<32x1xf32>
    %c0_163 = arith.constant 0 : index
    %c0_164 = arith.constant 0 : index
    %304 = vector.load %arg6[%c0_163, %c0_164] : memref<32x128xf32, #tpu.memory_space<vmem>>, vector<32x128xf32>
    %305 = vector.broadcast %303 : vector<32x1xf32> to vector<32x128xf32>
    %306 = vector.broadcast %296 : vector<1x128xf32> to vector<32x128xf32>
    %307 = arith.mulf %305, %306 : vector<32x128xf32>
    %308 = arith.addf %304, %307 : vector<32x128xf32>
    %c0_165 = arith.constant 0 : index
    %c0_166 = arith.constant 0 : index
    %309 = vector.load %arg6[%c0_165, %c0_166] : memref<32x128xf32, #tpu.memory_space<vmem>>, vector<32x128xf32>
    tpu.vector_store %arg6[%c0_165, %c0_166], %308 {strides = array<i32>} : memref<32x128xf32, #tpu.memory_space<vmem>>, vector<32x128xf32>,
    %c16_i32 = arith.constant 16 : i32
    %310 = arith.index_cast %c16_i32 : i32 to index
    %c0_167 = arith.constant 0 : index
    %311 = vector.load %arg6[%310, %c0_167] : memref<32x128xf32, #tpu.memory_space<vmem>>, vector<1x128xf32>
    %cst_168 = arith.constant 2.500000e-01 : f32
    %312 = vector.broadcast %cst_168 : f32 to vector<1x128xf32>
    %313 = arith.cmpf oge, %311, %312 : vector<1x128xf32>
    %314 = arith.extui %313 : vector<1x128xi1> to vector<1x128xi32>
    %315 = arith.sitofp %314 : vector<1x128xi32> to vector<1x128xf32>
    %cst_169 = arith.constant 1.000000e+00 : f32
    %316 = vector.broadcast %cst_169 : f32 to vector<1x128xf32>
    %317 = arith.mulf %315, %316 : vector<1x128xf32>
    %318 = arith.index_cast %c16_i32 : i32 to index
    %c0_170 = arith.constant 0 : index
    %319 = vector.load %arg5[%318, %c0_170] : memref<32x128xf32, #tpu.memory_space<vmem>>, vector<1x128xf32>
    tpu.vector_store %arg5[%318, %c0_170], %317 {strides = array<i32>} : memref<32x128xf32, #tpu.memory_space<vmem>>, vector<1x128xf32>,
    %c32_i32_171 = arith.constant 32 : i32
    %320 = arith.subi %c32_i32_171, %c16_i32 : i32
    %321 = arith.index_cast %320 : i32 to index
    %c0_172 = arith.constant 0 : index
    %322 = vector.load %arg4[%321, %c0_172] : memref<64x1xf32, #tpu.memory_space<vmem>>, vector<32x1xf32>
    %c0_173 = arith.constant 0 : index
    %c0_174 = arith.constant 0 : index
    %323 = vector.load %arg6[%c0_173, %c0_174] : memref<32x128xf32, #tpu.memory_space<vmem>>, vector<32x128xf32>
    %324 = vector.broadcast %322 : vector<32x1xf32> to vector<32x128xf32>
    %325 = vector.broadcast %315 : vector<1x128xf32> to vector<32x128xf32>
    %326 = arith.mulf %324, %325 : vector<32x128xf32>
    %327 = arith.addf %323, %326 : vector<32x128xf32>
    %c0_175 = arith.constant 0 : index
    %c0_176 = arith.constant 0 : index
    %328 = vector.load %arg6[%c0_175, %c0_176] : memref<32x128xf32, #tpu.memory_space<vmem>>, vector<32x128xf32>
    tpu.vector_store %arg6[%c0_175, %c0_176], %327 {strides = array<i32>} : memref<32x128xf32, #tpu.memory_space<vmem>>, vector<32x128xf32>,
    %c17_i32 = arith.constant 17 : i32
    %329 = arith.index_cast %c17_i32 : i32 to index
    %c0_177 = arith.constant 0 : index
    %330 = vector.load %arg6[%329, %c0_177] : memref<32x128xf32, #tpu.memory_space<vmem>>, vector<1x128xf32>
    %cst_178 = arith.constant 2.500000e-01 : f32
    %331 = vector.broadcast %cst_178 : f32 to vector<1x128xf32>
    %332 = arith.cmpf oge, %330, %331 : vector<1x128xf32>
    %333 = arith.extui %332 : vector<1x128xi1> to vector<1x128xi32>
    %334 = arith.sitofp %333 : vector<1x128xi32> to vector<1x128xf32>
    %cst_179 = arith.constant 1.000000e+00 : f32
    %335 = vector.broadcast %cst_179 : f32 to vector<1x128xf32>
    %336 = arith.mulf %334, %335 : vector<1x128xf32>
    %337 = arith.index_cast %c17_i32 : i32 to index
    %c0_180 = arith.constant 0 : index
    %338 = vector.load %arg5[%337, %c0_180] : memref<32x128xf32, #tpu.memory_space<vmem>>, vector<1x128xf32>
    tpu.vector_store %arg5[%337, %c0_180], %336 {strides = array<i32>} : memref<32x128xf32, #tpu.memory_space<vmem>>, vector<1x128xf32>,
    %c32_i32_181 = arith.constant 32 : i32
    %339 = arith.subi %c32_i32_181, %c17_i32 : i32
    %340 = arith.index_cast %339 : i32 to index
    %c0_182 = arith.constant 0 : index
    %341 = vector.load %arg4[%340, %c0_182] : memref<64x1xf32, #tpu.memory_space<vmem>>, vector<32x1xf32>
    %c0_183 = arith.constant 0 : index
    %c0_184 = arith.constant 0 : index
    %342 = vector.load %arg6[%c0_183, %c0_184] : memref<32x128xf32, #tpu.memory_space<vmem>>, vector<32x128xf32>
    %343 = vector.broadcast %341 : vector<32x1xf32> to vector<32x128xf32>
    %344 = vector.broadcast %334 : vector<1x128xf32> to vector<32x128xf32>
    %345 = arith.mulf %343, %344 : vector<32x128xf32>
    %346 = arith.addf %342, %345 : vector<32x128xf32>
    %c0_185 = arith.constant 0 : index
    %c0_186 = arith.constant 0 : index
    %347 = vector.load %arg6[%c0_185, %c0_186] : memref<32x128xf32, #tpu.memory_space<vmem>>, vector<32x128xf32>
    tpu.vector_store %arg6[%c0_185, %c0_186], %346 {strides = array<i32>} : memref<32x128xf32, #tpu.memory_space<vmem>>, vector<32x128xf32>,
    %c18_i32 = arith.constant 18 : i32
    %348 = arith.index_cast %c18_i32 : i32 to index
    %c0_187 = arith.constant 0 : index
    %349 = vector.load %arg6[%348, %c0_187] : memref<32x128xf32, #tpu.memory_space<vmem>>, vector<1x128xf32>
    %cst_188 = arith.constant 2.500000e-01 : f32
    %350 = vector.broadcast %cst_188 : f32 to vector<1x128xf32>
    %351 = arith.cmpf oge, %349, %350 : vector<1x128xf32>
    %352 = arith.extui %351 : vector<1x128xi1> to vector<1x128xi32>
    %353 = arith.sitofp %352 : vector<1x128xi32> to vector<1x128xf32>
    %cst_189 = arith.constant 1.000000e+00 : f32
    %354 = vector.broadcast %cst_189 : f32 to vector<1x128xf32>
    %355 = arith.mulf %353, %354 : vector<1x128xf32>
    %356 = arith.index_cast %c18_i32 : i32 to index
    %c0_190 = arith.constant 0 : index
    %357 = vector.load %arg5[%356, %c0_190] : memref<32x128xf32, #tpu.memory_space<vmem>>, vector<1x128xf32>
    tpu.vector_store %arg5[%356, %c0_190], %355 {strides = array<i32>} : memref<32x128xf32, #tpu.memory_space<vmem>>, vector<1x128xf32>,
    %c32_i32_191 = arith.constant 32 : i32
    %358 = arith.subi %c32_i32_191, %c18_i32 : i32
    %359 = arith.index_cast %358 : i32 to index
    %c0_192 = arith.constant 0 : index
    %360 = vector.load %arg4[%359, %c0_192] : memref<64x1xf32, #tpu.memory_space<vmem>>, vector<32x1xf32>
    %c0_193 = arith.constant 0 : index
    %c0_194 = arith.constant 0 : index
    %361 = vector.load %arg6[%c0_193, %c0_194] : memref<32x128xf32, #tpu.memory_space<vmem>>, vector<32x128xf32>
    %362 = vector.broadcast %360 : vector<32x1xf32> to vector<32x128xf32>
    %363 = vector.broadcast %353 : vector<1x128xf32> to vector<32x128xf32>
    %364 = arith.mulf %362, %363 : vector<32x128xf32>
    %365 = arith.addf %361, %364 : vector<32x128xf32>
    %c0_195 = arith.constant 0 : index
    %c0_196 = arith.constant 0 : index
    %366 = vector.load %arg6[%c0_195, %c0_196] : memref<32x128xf32, #tpu.memory_space<vmem>>, vector<32x128xf32>
    tpu.vector_store %arg6[%c0_195, %c0_196], %365 {strides = array<i32>} : memref<32x128xf32, #tpu.memory_space<vmem>>, vector<32x128xf32>,
    %c19_i32 = arith.constant 19 : i32
    %367 = arith.index_cast %c19_i32 : i32 to index
    %c0_197 = arith.constant 0 : index
    %368 = vector.load %arg6[%367, %c0_197] : memref<32x128xf32, #tpu.memory_space<vmem>>, vector<1x128xf32>
    %cst_198 = arith.constant 2.500000e-01 : f32
    %369 = vector.broadcast %cst_198 : f32 to vector<1x128xf32>
    %370 = arith.cmpf oge, %368, %369 : vector<1x128xf32>
    %371 = arith.extui %370 : vector<1x128xi1> to vector<1x128xi32>
    %372 = arith.sitofp %371 : vector<1x128xi32> to vector<1x128xf32>
    %cst_199 = arith.constant 1.000000e+00 : f32
    %373 = vector.broadcast %cst_199 : f32 to vector<1x128xf32>
    %374 = arith.mulf %372, %373 : vector<1x128xf32>
    %375 = arith.index_cast %c19_i32 : i32 to index
    %c0_200 = arith.constant 0 : index
    %376 = vector.load %arg5[%375, %c0_200] : memref<32x128xf32, #tpu.memory_space<vmem>>, vector<1x128xf32>
    tpu.vector_store %arg5[%375, %c0_200], %374 {strides = array<i32>} : memref<32x128xf32, #tpu.memory_space<vmem>>, vector<1x128xf32>,
    %c32_i32_201 = arith.constant 32 : i32
    %377 = arith.subi %c32_i32_201, %c19_i32 : i32
    %378 = arith.index_cast %377 : i32 to index
    %c0_202 = arith.constant 0 : index
    %379 = vector.load %arg4[%378, %c0_202] : memref<64x1xf32, #tpu.memory_space<vmem>>, vector<32x1xf32>
    %c0_203 = arith.constant 0 : index
    %c0_204 = arith.constant 0 : index
    %380 = vector.load %arg6[%c0_203, %c0_204] : memref<32x128xf32, #tpu.memory_space<vmem>>, vector<32x128xf32>
    %381 = vector.broadcast %379 : vector<32x1xf32> to vector<32x128xf32>
    %382 = vector.broadcast %372 : vector<1x128xf32> to vector<32x128xf32>
    %383 = arith.mulf %381, %382 : vector<32x128xf32>
    %384 = arith.addf %380, %383 : vector<32x128xf32>
    %c0_205 = arith.constant 0 : index
    %c0_206 = arith.constant 0 : index
    %385 = vector.load %arg6[%c0_205, %c0_206] : memref<32x128xf32, #tpu.memory_space<vmem>>, vector<32x128xf32>
    tpu.vector_store %arg6[%c0_205, %c0_206], %384 {strides = array<i32>} : memref<32x128xf32, #tpu.memory_space<vmem>>, vector<32x128xf32>,
    %c20_i32 = arith.constant 20 : i32
    %386 = arith.index_cast %c20_i32 : i32 to index
    %c0_207 = arith.constant 0 : index
    %387 = vector.load %arg6[%386, %c0_207] : memref<32x128xf32, #tpu.memory_space<vmem>>, vector<1x128xf32>
    %cst_208 = arith.constant 2.500000e-01 : f32
    %388 = vector.broadcast %cst_208 : f32 to vector<1x128xf32>
    %389 = arith.cmpf oge, %387, %388 : vector<1x128xf32>
    %390 = arith.extui %389 : vector<1x128xi1> to vector<1x128xi32>
    %391 = arith.sitofp %390 : vector<1x128xi32> to vector<1x128xf32>
    %cst_209 = arith.constant 1.000000e+00 : f32
    %392 = vector.broadcast %cst_209 : f32 to vector<1x128xf32>
    %393 = arith.mulf %391, %392 : vector<1x128xf32>
    %394 = arith.index_cast %c20_i32 : i32 to index
    %c0_210 = arith.constant 0 : index
    %395 = vector.load %arg5[%394, %c0_210] : memref<32x128xf32, #tpu.memory_space<vmem>>, vector<1x128xf32>
    tpu.vector_store %arg5[%394, %c0_210], %393 {strides = array<i32>} : memref<32x128xf32, #tpu.memory_space<vmem>>, vector<1x128xf32>,
    %c32_i32_211 = arith.constant 32 : i32
    %396 = arith.subi %c32_i32_211, %c20_i32 : i32
    %397 = arith.index_cast %396 : i32 to index
    %c0_212 = arith.constant 0 : index
    %398 = vector.load %arg4[%397, %c0_212] : memref<64x1xf32, #tpu.memory_space<vmem>>, vector<32x1xf32>
    %c0_213 = arith.constant 0 : index
    %c0_214 = arith.constant 0 : index
    %399 = vector.load %arg6[%c0_213, %c0_214] : memref<32x128xf32, #tpu.memory_space<vmem>>, vector<32x128xf32>
    %400 = vector.broadcast %398 : vector<32x1xf32> to vector<32x128xf32>
    %401 = vector.broadcast %391 : vector<1x128xf32> to vector<32x128xf32>
    %402 = arith.mulf %400, %401 : vector<32x128xf32>
    %403 = arith.addf %399, %402 : vector<32x128xf32>
    %c0_215 = arith.constant 0 : index
    %c0_216 = arith.constant 0 : index
    %404 = vector.load %arg6[%c0_215, %c0_216] : memref<32x128xf32, #tpu.memory_space<vmem>>, vector<32x128xf32>
    tpu.vector_store %arg6[%c0_215, %c0_216], %403 {strides = array<i32>} : memref<32x128xf32, #tpu.memory_space<vmem>>, vector<32x128xf32>,
    %c21_i32 = arith.constant 21 : i32
    %405 = arith.index_cast %c21_i32 : i32 to index
    %c0_217 = arith.constant 0 : index
    %406 = vector.load %arg6[%405, %c0_217] : memref<32x128xf32, #tpu.memory_space<vmem>>, vector<1x128xf32>
    %cst_218 = arith.constant 2.500000e-01 : f32
    %407 = vector.broadcast %cst_218 : f32 to vector<1x128xf32>
    %408 = arith.cmpf oge, %406, %407 : vector<1x128xf32>
    %409 = arith.extui %408 : vector<1x128xi1> to vector<1x128xi32>
    %410 = arith.sitofp %409 : vector<1x128xi32> to vector<1x128xf32>
    %cst_219 = arith.constant 1.000000e+00 : f32
    %411 = vector.broadcast %cst_219 : f32 to vector<1x128xf32>
    %412 = arith.mulf %410, %411 : vector<1x128xf32>
    %413 = arith.index_cast %c21_i32 : i32 to index
    %c0_220 = arith.constant 0 : index
    %414 = vector.load %arg5[%413, %c0_220] : memref<32x128xf32, #tpu.memory_space<vmem>>, vector<1x128xf32>
    tpu.vector_store %arg5[%413, %c0_220], %412 {strides = array<i32>} : memref<32x128xf32, #tpu.memory_space<vmem>>, vector<1x128xf32>,
    %c32_i32_221 = arith.constant 32 : i32
    %415 = arith.subi %c32_i32_221, %c21_i32 : i32
    %416 = arith.index_cast %415 : i32 to index
    %c0_222 = arith.constant 0 : index
    %417 = vector.load %arg4[%416, %c0_222] : memref<64x1xf32, #tpu.memory_space<vmem>>, vector<32x1xf32>
    %c0_223 = arith.constant 0 : index
    %c0_224 = arith.constant 0 : index
    %418 = vector.load %arg6[%c0_223, %c0_224] : memref<32x128xf32, #tpu.memory_space<vmem>>, vector<32x128xf32>
    %419 = vector.broadcast %417 : vector<32x1xf32> to vector<32x128xf32>
    %420 = vector.broadcast %410 : vector<1x128xf32> to vector<32x128xf32>
    %421 = arith.mulf %419, %420 : vector<32x128xf32>
    %422 = arith.addf %418, %421 : vector<32x128xf32>
    %c0_225 = arith.constant 0 : index
    %c0_226 = arith.constant 0 : index
    %423 = vector.load %arg6[%c0_225, %c0_226] : memref<32x128xf32, #tpu.memory_space<vmem>>, vector<32x128xf32>
    tpu.vector_store %arg6[%c0_225, %c0_226], %422 {strides = array<i32>} : memref<32x128xf32, #tpu.memory_space<vmem>>, vector<32x128xf32>,
    %c22_i32 = arith.constant 22 : i32
    %424 = arith.index_cast %c22_i32 : i32 to index
    %c0_227 = arith.constant 0 : index
    %425 = vector.load %arg6[%424, %c0_227] : memref<32x128xf32, #tpu.memory_space<vmem>>, vector<1x128xf32>
    %cst_228 = arith.constant 2.500000e-01 : f32
    %426 = vector.broadcast %cst_228 : f32 to vector<1x128xf32>
    %427 = arith.cmpf oge, %425, %426 : vector<1x128xf32>
    %428 = arith.extui %427 : vector<1x128xi1> to vector<1x128xi32>
    %429 = arith.sitofp %428 : vector<1x128xi32> to vector<1x128xf32>
    %cst_229 = arith.constant 1.000000e+00 : f32
    %430 = vector.broadcast %cst_229 : f32 to vector<1x128xf32>
    %431 = arith.mulf %429, %430 : vector<1x128xf32>
    %432 = arith.index_cast %c22_i32 : i32 to index
    %c0_230 = arith.constant 0 : index
    %433 = vector.load %arg5[%432, %c0_230] : memref<32x128xf32, #tpu.memory_space<vmem>>, vector<1x128xf32>
    tpu.vector_store %arg5[%432, %c0_230], %431 {strides = array<i32>} : memref<32x128xf32, #tpu.memory_space<vmem>>, vector<1x128xf32>,
    %c32_i32_231 = arith.constant 32 : i32
    %434 = arith.subi %c32_i32_231, %c22_i32 : i32
    %435 = arith.index_cast %434 : i32 to index
    %c0_232 = arith.constant 0 : index
    %436 = vector.load %arg4[%435, %c0_232] : memref<64x1xf32, #tpu.memory_space<vmem>>, vector<32x1xf32>
    %c0_233 = arith.constant 0 : index
    %c0_234 = arith.constant 0 : index
    %437 = vector.load %arg6[%c0_233, %c0_234] : memref<32x128xf32, #tpu.memory_space<vmem>>, vector<32x128xf32>
    %438 = vector.broadcast %436 : vector<32x1xf32> to vector<32x128xf32>
    %439 = vector.broadcast %429 : vector<1x128xf32> to vector<32x128xf32>
    %440 = arith.mulf %438, %439 : vector<32x128xf32>
    %441 = arith.addf %437, %440 : vector<32x128xf32>
    %c0_235 = arith.constant 0 : index
    %c0_236 = arith.constant 0 : index
    %442 = vector.load %arg6[%c0_235, %c0_236] : memref<32x128xf32, #tpu.memory_space<vmem>>, vector<32x128xf32>
    tpu.vector_store %arg6[%c0_235, %c0_236], %441 {strides = array<i32>} : memref<32x128xf32, #tpu.memory_space<vmem>>, vector<32x128xf32>,
    %c23_i32 = arith.constant 23 : i32
    %443 = arith.index_cast %c23_i32 : i32 to index
    %c0_237 = arith.constant 0 : index
    %444 = vector.load %arg6[%443, %c0_237] : memref<32x128xf32, #tpu.memory_space<vmem>>, vector<1x128xf32>
    %cst_238 = arith.constant 2.500000e-01 : f32
    %445 = vector.broadcast %cst_238 : f32 to vector<1x128xf32>
    %446 = arith.cmpf oge, %444, %445 : vector<1x128xf32>
    %447 = arith.extui %446 : vector<1x128xi1> to vector<1x128xi32>
    %448 = arith.sitofp %447 : vector<1x128xi32> to vector<1x128xf32>
    %cst_239 = arith.constant 1.000000e+00 : f32
    %449 = vector.broadcast %cst_239 : f32 to vector<1x128xf32>
    %450 = arith.mulf %448, %449 : vector<1x128xf32>
    %451 = arith.index_cast %c23_i32 : i32 to index
    %c0_240 = arith.constant 0 : index
    %452 = vector.load %arg5[%451, %c0_240] : memref<32x128xf32, #tpu.memory_space<vmem>>, vector<1x128xf32>
    tpu.vector_store %arg5[%451, %c0_240], %450 {strides = array<i32>} : memref<32x128xf32, #tpu.memory_space<vmem>>, vector<1x128xf32>,
    %c32_i32_241 = arith.constant 32 : i32
    %453 = arith.subi %c32_i32_241, %c23_i32 : i32
    %454 = arith.index_cast %453 : i32 to index
    %c0_242 = arith.constant 0 : index
    %455 = vector.load %arg4[%454, %c0_242] : memref<64x1xf32, #tpu.memory_space<vmem>>, vector<32x1xf32>
    %c0_243 = arith.constant 0 : index
    %c0_244 = arith.constant 0 : index
    %456 = vector.load %arg6[%c0_243, %c0_244] : memref<32x128xf32, #tpu.memory_space<vmem>>, vector<32x128xf32>
    %457 = vector.broadcast %455 : vector<32x1xf32> to vector<32x128xf32>
    %458 = vector.broadcast %448 : vector<1x128xf32> to vector<32x128xf32>
    %459 = arith.mulf %457, %458 : vector<32x128xf32>
    %460 = arith.addf %456, %459 : vector<32x128xf32>
    %c0_245 = arith.constant 0 : index
    %c0_246 = arith.constant 0 : index
    %461 = vector.load %arg6[%c0_245, %c0_246] : memref<32x128xf32, #tpu.memory_space<vmem>>, vector<32x128xf32>
    tpu.vector_store %arg6[%c0_245, %c0_246], %460 {strides = array<i32>} : memref<32x128xf32, #tpu.memory_space<vmem>>, vector<32x128xf32>,
    %c24_i32 = arith.constant 24 : i32
    %462 = arith.index_cast %c24_i32 : i32 to index
    %c0_247 = arith.constant 0 : index
    %463 = vector.load %arg6[%462, %c0_247] : memref<32x128xf32, #tpu.memory_space<vmem>>, vector<1x128xf32>
    %cst_248 = arith.constant 2.500000e-01 : f32
    %464 = vector.broadcast %cst_248 : f32 to vector<1x128xf32>
    %465 = arith.cmpf oge, %463, %464 : vector<1x128xf32>
    %466 = arith.extui %465 : vector<1x128xi1> to vector<1x128xi32>
    %467 = arith.sitofp %466 : vector<1x128xi32> to vector<1x128xf32>
    %cst_249 = arith.constant 1.000000e+00 : f32
    %468 = vector.broadcast %cst_249 : f32 to vector<1x128xf32>
    %469 = arith.mulf %467, %468 : vector<1x128xf32>
    %470 = arith.index_cast %c24_i32 : i32 to index
    %c0_250 = arith.constant 0 : index
    %471 = vector.load %arg5[%470, %c0_250] : memref<32x128xf32, #tpu.memory_space<vmem>>, vector<1x128xf32>
    tpu.vector_store %arg5[%470, %c0_250], %469 {strides = array<i32>} : memref<32x128xf32, #tpu.memory_space<vmem>>, vector<1x128xf32>,
    %c32_i32_251 = arith.constant 32 : i32
    %472 = arith.subi %c32_i32_251, %c24_i32 : i32
    %473 = arith.index_cast %472 : i32 to index
    %c0_252 = arith.constant 0 : index
    %474 = vector.load %arg4[%473, %c0_252] : memref<64x1xf32, #tpu.memory_space<vmem>>, vector<32x1xf32>
    %c0_253 = arith.constant 0 : index
    %c0_254 = arith.constant 0 : index
    %475 = vector.load %arg6[%c0_253, %c0_254] : memref<32x128xf32, #tpu.memory_space<vmem>>, vector<32x128xf32>
    %476 = vector.broadcast %474 : vector<32x1xf32> to vector<32x128xf32>
    %477 = vector.broadcast %467 : vector<1x128xf32> to vector<32x128xf32>
    %478 = arith.mulf %476, %477 : vector<32x128xf32>
    %479 = arith.addf %475, %478 : vector<32x128xf32>
    %c0_255 = arith.constant 0 : index
    %c0_256 = arith.constant 0 : index
    %480 = vector.load %arg6[%c0_255, %c0_256] : memref<32x128xf32, #tpu.memory_space<vmem>>, vector<32x128xf32>
    tpu.vector_store %arg6[%c0_255, %c0_256], %479 {strides = array<i32>} : memref<32x128xf32, #tpu.memory_space<vmem>>, vector<32x128xf32>,
    %c25_i32 = arith.constant 25 : i32
    %481 = arith.index_cast %c25_i32 : i32 to index
    %c0_257 = arith.constant 0 : index
    %482 = vector.load %arg6[%481, %c0_257] : memref<32x128xf32, #tpu.memory_space<vmem>>, vector<1x128xf32>
    %cst_258 = arith.constant 2.500000e-01 : f32
    %483 = vector.broadcast %cst_258 : f32 to vector<1x128xf32>
    %484 = arith.cmpf oge, %482, %483 : vector<1x128xf32>
    %485 = arith.extui %484 : vector<1x128xi1> to vector<1x128xi32>
    %486 = arith.sitofp %485 : vector<1x128xi32> to vector<1x128xf32>
    %cst_259 = arith.constant 1.000000e+00 : f32
    %487 = vector.broadcast %cst_259 : f32 to vector<1x128xf32>
    %488 = arith.mulf %486, %487 : vector<1x128xf32>
    %489 = arith.index_cast %c25_i32 : i32 to index
    %c0_260 = arith.constant 0 : index
    %490 = vector.load %arg5[%489, %c0_260] : memref<32x128xf32, #tpu.memory_space<vmem>>, vector<1x128xf32>
    tpu.vector_store %arg5[%489, %c0_260], %488 {strides = array<i32>} : memref<32x128xf32, #tpu.memory_space<vmem>>, vector<1x128xf32>,
    %c32_i32_261 = arith.constant 32 : i32
    %491 = arith.subi %c32_i32_261, %c25_i32 : i32
    %492 = arith.index_cast %491 : i32 to index
    %c0_262 = arith.constant 0 : index
    %493 = vector.load %arg4[%492, %c0_262] : memref<64x1xf32, #tpu.memory_space<vmem>>, vector<32x1xf32>
    %c0_263 = arith.constant 0 : index
    %c0_264 = arith.constant 0 : index
    %494 = vector.load %arg6[%c0_263, %c0_264] : memref<32x128xf32, #tpu.memory_space<vmem>>, vector<32x128xf32>
    %495 = vector.broadcast %493 : vector<32x1xf32> to vector<32x128xf32>
    %496 = vector.broadcast %486 : vector<1x128xf32> to vector<32x128xf32>
    %497 = arith.mulf %495, %496 : vector<32x128xf32>
    %498 = arith.addf %494, %497 : vector<32x128xf32>
    %c0_265 = arith.constant 0 : index
    %c0_266 = arith.constant 0 : index
    %499 = vector.load %arg6[%c0_265, %c0_266] : memref<32x128xf32, #tpu.memory_space<vmem>>, vector<32x128xf32>
    tpu.vector_store %arg6[%c0_265, %c0_266], %498 {strides = array<i32>} : memref<32x128xf32, #tpu.memory_space<vmem>>, vector<32x128xf32>,
    %c26_i32 = arith.constant 26 : i32
    %500 = arith.index_cast %c26_i32 : i32 to index
    %c0_267 = arith.constant 0 : index
    %501 = vector.load %arg6[%500, %c0_267] : memref<32x128xf32, #tpu.memory_space<vmem>>, vector<1x128xf32>
    %cst_268 = arith.constant 2.500000e-01 : f32
    %502 = vector.broadcast %cst_268 : f32 to vector<1x128xf32>
    %503 = arith.cmpf oge, %501, %502 : vector<1x128xf32>
    %504 = arith.extui %503 : vector<1x128xi1> to vector<1x128xi32>
    %505 = arith.sitofp %504 : vector<1x128xi32> to vector<1x128xf32>
    %cst_269 = arith.constant 1.000000e+00 : f32
    %506 = vector.broadcast %cst_269 : f32 to vector<1x128xf32>
    %507 = arith.mulf %505, %506 : vector<1x128xf32>
    %508 = arith.index_cast %c26_i32 : i32 to index
    %c0_270 = arith.constant 0 : index
    %509 = vector.load %arg5[%508, %c0_270] : memref<32x128xf32, #tpu.memory_space<vmem>>, vector<1x128xf32>
    tpu.vector_store %arg5[%508, %c0_270], %507 {strides = array<i32>} : memref<32x128xf32, #tpu.memory_space<vmem>>, vector<1x128xf32>,
    %c32_i32_271 = arith.constant 32 : i32
    %510 = arith.subi %c32_i32_271, %c26_i32 : i32
    %511 = arith.index_cast %510 : i32 to index
    %c0_272 = arith.constant 0 : index
    %512 = vector.load %arg4[%511, %c0_272] : memref<64x1xf32, #tpu.memory_space<vmem>>, vector<32x1xf32>
    %c0_273 = arith.constant 0 : index
    %c0_274 = arith.constant 0 : index
    %513 = vector.load %arg6[%c0_273, %c0_274] : memref<32x128xf32, #tpu.memory_space<vmem>>, vector<32x128xf32>
    %514 = vector.broadcast %512 : vector<32x1xf32> to vector<32x128xf32>
    %515 = vector.broadcast %505 : vector<1x128xf32> to vector<32x128xf32>
    %516 = arith.mulf %514, %515 : vector<32x128xf32>
    %517 = arith.addf %513, %516 : vector<32x128xf32>
    %c0_275 = arith.constant 0 : index
    %c0_276 = arith.constant 0 : index
    %518 = vector.load %arg6[%c0_275, %c0_276] : memref<32x128xf32, #tpu.memory_space<vmem>>, vector<32x128xf32>
    tpu.vector_store %arg6[%c0_275, %c0_276], %517 {strides = array<i32>} : memref<32x128xf32, #tpu.memory_space<vmem>>, vector<32x128xf32>,
    %c27_i32 = arith.constant 27 : i32
    %519 = arith.index_cast %c27_i32 : i32 to index
    %c0_277 = arith.constant 0 : index
    %520 = vector.load %arg6[%519, %c0_277] : memref<32x128xf32, #tpu.memory_space<vmem>>, vector<1x128xf32>
    %cst_278 = arith.constant 2.500000e-01 : f32
    %521 = vector.broadcast %cst_278 : f32 to vector<1x128xf32>
    %522 = arith.cmpf oge, %520, %521 : vector<1x128xf32>
    %523 = arith.extui %522 : vector<1x128xi1> to vector<1x128xi32>
    %524 = arith.sitofp %523 : vector<1x128xi32> to vector<1x128xf32>
    %cst_279 = arith.constant 1.000000e+00 : f32
    %525 = vector.broadcast %cst_279 : f32 to vector<1x128xf32>
    %526 = arith.mulf %524, %525 : vector<1x128xf32>
    %527 = arith.index_cast %c27_i32 : i32 to index
    %c0_280 = arith.constant 0 : index
    %528 = vector.load %arg5[%527, %c0_280] : memref<32x128xf32, #tpu.memory_space<vmem>>, vector<1x128xf32>
    tpu.vector_store %arg5[%527, %c0_280], %526 {strides = array<i32>} : memref<32x128xf32, #tpu.memory_space<vmem>>, vector<1x128xf32>,
    %c32_i32_281 = arith.constant 32 : i32
    %529 = arith.subi %c32_i32_281, %c27_i32 : i32
    %530 = arith.index_cast %529 : i32 to index
    %c0_282 = arith.constant 0 : index
    %531 = vector.load %arg4[%530, %c0_282] : memref<64x1xf32, #tpu.memory_space<vmem>>, vector<32x1xf32>
    %c0_283 = arith.constant 0 : index
    %c0_284 = arith.constant 0 : index
    %532 = vector.load %arg6[%c0_283, %c0_284] : memref<32x128xf32, #tpu.memory_space<vmem>>, vector<32x128xf32>
    %533 = vector.broadcast %531 : vector<32x1xf32> to vector<32x128xf32>
    %534 = vector.broadcast %524 : vector<1x128xf32> to vector<32x128xf32>
    %535 = arith.mulf %533, %534 : vector<32x128xf32>
    %536 = arith.addf %532, %535 : vector<32x128xf32>
    %c0_285 = arith.constant 0 : index
    %c0_286 = arith.constant 0 : index
    %537 = vector.load %arg6[%c0_285, %c0_286] : memref<32x128xf32, #tpu.memory_space<vmem>>, vector<32x128xf32>
    tpu.vector_store %arg6[%c0_285, %c0_286], %536 {strides = array<i32>} : memref<32x128xf32, #tpu.memory_space<vmem>>, vector<32x128xf32>,
    %c28_i32 = arith.constant 28 : i32
    %538 = arith.index_cast %c28_i32 : i32 to index
    %c0_287 = arith.constant 0 : index
    %539 = vector.load %arg6[%538, %c0_287] : memref<32x128xf32, #tpu.memory_space<vmem>>, vector<1x128xf32>
    %cst_288 = arith.constant 2.500000e-01 : f32
    %540 = vector.broadcast %cst_288 : f32 to vector<1x128xf32>
    %541 = arith.cmpf oge, %539, %540 : vector<1x128xf32>
    %542 = arith.extui %541 : vector<1x128xi1> to vector<1x128xi32>
    %543 = arith.sitofp %542 : vector<1x128xi32> to vector<1x128xf32>
    %cst_289 = arith.constant 1.000000e+00 : f32
    %544 = vector.broadcast %cst_289 : f32 to vector<1x128xf32>
    %545 = arith.mulf %543, %544 : vector<1x128xf32>
    %546 = arith.index_cast %c28_i32 : i32 to index
    %c0_290 = arith.constant 0 : index
    %547 = vector.load %arg5[%546, %c0_290] : memref<32x128xf32, #tpu.memory_space<vmem>>, vector<1x128xf32>
    tpu.vector_store %arg5[%546, %c0_290], %545 {strides = array<i32>} : memref<32x128xf32, #tpu.memory_space<vmem>>, vector<1x128xf32>,
    %c32_i32_291 = arith.constant 32 : i32
    %548 = arith.subi %c32_i32_291, %c28_i32 : i32
    %549 = arith.index_cast %548 : i32 to index
    %c0_292 = arith.constant 0 : index
    %550 = vector.load %arg4[%549, %c0_292] : memref<64x1xf32, #tpu.memory_space<vmem>>, vector<32x1xf32>
    %c0_293 = arith.constant 0 : index
    %c0_294 = arith.constant 0 : index
    %551 = vector.load %arg6[%c0_293, %c0_294] : memref<32x128xf32, #tpu.memory_space<vmem>>, vector<32x128xf32>
    %552 = vector.broadcast %550 : vector<32x1xf32> to vector<32x128xf32>
    %553 = vector.broadcast %543 : vector<1x128xf32> to vector<32x128xf32>
    %554 = arith.mulf %552, %553 : vector<32x128xf32>
    %555 = arith.addf %551, %554 : vector<32x128xf32>
    %c0_295 = arith.constant 0 : index
    %c0_296 = arith.constant 0 : index
    %556 = vector.load %arg6[%c0_295, %c0_296] : memref<32x128xf32, #tpu.memory_space<vmem>>, vector<32x128xf32>
    tpu.vector_store %arg6[%c0_295, %c0_296], %555 {strides = array<i32>} : memref<32x128xf32, #tpu.memory_space<vmem>>, vector<32x128xf32>,
    %c29_i32 = arith.constant 29 : i32
    %557 = arith.index_cast %c29_i32 : i32 to index
    %c0_297 = arith.constant 0 : index
    %558 = vector.load %arg6[%557, %c0_297] : memref<32x128xf32, #tpu.memory_space<vmem>>, vector<1x128xf32>
    %cst_298 = arith.constant 2.500000e-01 : f32
    %559 = vector.broadcast %cst_298 : f32 to vector<1x128xf32>
    %560 = arith.cmpf oge, %558, %559 : vector<1x128xf32>
    %561 = arith.extui %560 : vector<1x128xi1> to vector<1x128xi32>
    %562 = arith.sitofp %561 : vector<1x128xi32> to vector<1x128xf32>
    %cst_299 = arith.constant 1.000000e+00 : f32
    %563 = vector.broadcast %cst_299 : f32 to vector<1x128xf32>
    %564 = arith.mulf %562, %563 : vector<1x128xf32>
    %565 = arith.index_cast %c29_i32 : i32 to index
    %c0_300 = arith.constant 0 : index
    %566 = vector.load %arg5[%565, %c0_300] : memref<32x128xf32, #tpu.memory_space<vmem>>, vector<1x128xf32>
    tpu.vector_store %arg5[%565, %c0_300], %564 {strides = array<i32>} : memref<32x128xf32, #tpu.memory_space<vmem>>, vector<1x128xf32>,
    %c32_i32_301 = arith.constant 32 : i32
    %567 = arith.subi %c32_i32_301, %c29_i32 : i32
    %568 = arith.index_cast %567 : i32 to index
    %c0_302 = arith.constant 0 : index
    %569 = vector.load %arg4[%568, %c0_302] : memref<64x1xf32, #tpu.memory_space<vmem>>, vector<32x1xf32>
    %c0_303 = arith.constant 0 : index
    %c0_304 = arith.constant 0 : index
    %570 = vector.load %arg6[%c0_303, %c0_304] : memref<32x128xf32, #tpu.memory_space<vmem>>, vector<32x128xf32>
    %571 = vector.broadcast %569 : vector<32x1xf32> to vector<32x128xf32>
    %572 = vector.broadcast %562 : vector<1x128xf32> to vector<32x128xf32>
    %573 = arith.mulf %571, %572 : vector<32x128xf32>
    %574 = arith.addf %570, %573 : vector<32x128xf32>
    %c0_305 = arith.constant 0 : index
    %c0_306 = arith.constant 0 : index
    %575 = vector.load %arg6[%c0_305, %c0_306] : memref<32x128xf32, #tpu.memory_space<vmem>>, vector<32x128xf32>
    tpu.vector_store %arg6[%c0_305, %c0_306], %574 {strides = array<i32>} : memref<32x128xf32, #tpu.memory_space<vmem>>, vector<32x128xf32>,
    %c30_i32 = arith.constant 30 : i32
    %576 = arith.index_cast %c30_i32 : i32 to index
    %c0_307 = arith.constant 0 : index
    %577 = vector.load %arg6[%576, %c0_307] : memref<32x128xf32, #tpu.memory_space<vmem>>, vector<1x128xf32>
    %cst_308 = arith.constant 2.500000e-01 : f32
    %578 = vector.broadcast %cst_308 : f32 to vector<1x128xf32>
    %579 = arith.cmpf oge, %577, %578 : vector<1x128xf32>
    %580 = arith.extui %579 : vector<1x128xi1> to vector<1x128xi32>
    %581 = arith.sitofp %580 : vector<1x128xi32> to vector<1x128xf32>
    %cst_309 = arith.constant 1.000000e+00 : f32
    %582 = vector.broadcast %cst_309 : f32 to vector<1x128xf32>
    %583 = arith.mulf %581, %582 : vector<1x128xf32>
    %584 = arith.index_cast %c30_i32 : i32 to index
    %c0_310 = arith.constant 0 : index
    %585 = vector.load %arg5[%584, %c0_310] : memref<32x128xf32, #tpu.memory_space<vmem>>, vector<1x128xf32>
    tpu.vector_store %arg5[%584, %c0_310], %583 {strides = array<i32>} : memref<32x128xf32, #tpu.memory_space<vmem>>, vector<1x128xf32>,
    %c32_i32_311 = arith.constant 32 : i32
    %586 = arith.subi %c32_i32_311, %c30_i32 : i32
    %587 = arith.index_cast %586 : i32 to index
    %c0_312 = arith.constant 0 : index
    %588 = vector.load %arg4[%587, %c0_312] : memref<64x1xf32, #tpu.memory_space<vmem>>, vector<32x1xf32>
    %c0_313 = arith.constant 0 : index
    %c0_314 = arith.constant 0 : index
    %589 = vector.load %arg6[%c0_313, %c0_314] : memref<32x128xf32, #tpu.memory_space<vmem>>, vector<32x128xf32>
    %590 = vector.broadcast %588 : vector<32x1xf32> to vector<32x128xf32>
    %591 = vector.broadcast %581 : vector<1x128xf32> to vector<32x128xf32>
    %592 = arith.mulf %590, %591 : vector<32x128xf32>
    %593 = arith.addf %589, %592 : vector<32x128xf32>
    %c0_315 = arith.constant 0 : index
    %c0_316 = arith.constant 0 : index
    %594 = vector.load %arg6[%c0_315, %c0_316] : memref<32x128xf32, #tpu.memory_space<vmem>>, vector<32x128xf32>
    tpu.vector_store %arg6[%c0_315, %c0_316], %593 {strides = array<i32>} : memref<32x128xf32, #tpu.memory_space<vmem>>, vector<32x128xf32>,
    %c31_i32 = arith.constant 31 : i32
    %595 = arith.index_cast %c31_i32 : i32 to index
    %c0_317 = arith.constant 0 : index
    %596 = vector.load %arg6[%595, %c0_317] : memref<32x128xf32, #tpu.memory_space<vmem>>, vector<1x128xf32>
    %cst_318 = arith.constant 2.500000e-01 : f32
    %597 = vector.broadcast %cst_318 : f32 to vector<1x128xf32>
    %598 = arith.cmpf oge, %596, %597 : vector<1x128xf32>
    %599 = arith.extui %598 : vector<1x128xi1> to vector<1x128xi32>
    %600 = arith.sitofp %599 : vector<1x128xi32> to vector<1x128xf32>
    %cst_319 = arith.constant 1.000000e+00 : f32
    %601 = vector.broadcast %cst_319 : f32 to vector<1x128xf32>
    %602 = arith.mulf %600, %601 : vector<1x128xf32>
    %603 = arith.index_cast %c31_i32 : i32 to index
    %c0_320 = arith.constant 0 : index
    %604 = vector.load %arg5[%603, %c0_320] : memref<32x128xf32, #tpu.memory_space<vmem>>, vector<1x128xf32>
    tpu.vector_store %arg5[%603, %c0_320], %602 {strides = array<i32>} : memref<32x128xf32, #tpu.memory_space<vmem>>, vector<1x128xf32>,
    %c32_i32_321 = arith.constant 32 : i32
    %605 = arith.subi %c32_i32_321, %c31_i32 : i32
    %606 = arith.index_cast %605 : i32 to index
    %c0_322 = arith.constant 0 : index
    %607 = vector.load %arg4[%606, %c0_322] : memref<64x1xf32, #tpu.memory_space<vmem>>, vector<32x1xf32>
    %c0_323 = arith.constant 0 : index
    %c0_324 = arith.constant 0 : index
    %608 = vector.load %arg6[%c0_323, %c0_324] : memref<32x128xf32, #tpu.memory_space<vmem>>, vector<32x128xf32>
    %609 = vector.broadcast %607 : vector<32x1xf32> to vector<32x128xf32>
    %610 = vector.broadcast %600 : vector<1x128xf32> to vector<32x128xf32>
    %611 = arith.mulf %609, %610 : vector<32x128xf32>
    %612 = arith.addf %608, %611 : vector<32x128xf32>
    %c0_325 = arith.constant 0 : index
    %c0_326 = arith.constant 0 : index
    %613 = vector.load %arg6[%c0_325, %c0_326] : memref<32x128xf32, #tpu.memory_space<vmem>>, vector<32x128xf32>
    tpu.vector_store %arg6[%c0_325, %c0_326], %612 {strides = array<i32>} : memref<32x128xf32, #tpu.memory_space<vmem>>, vector<32x128xf32>,
    %c32_i32_327 = arith.constant 32 : i32
    return
  }
  func.func @transform_0(%arg0: i32) -> (i32, i32) {
    %c0_i32 = arith.constant 0 : i32
    %c0_i32_0 = arith.constant 0 : i32
    return %c0_i32, %arg0 : i32, i32
  }
  func.func @transform_1(%arg0: i32) -> (i32, i32) {
    %c0_i32 = arith.constant 0 : i32
    %c0_i32_0 = arith.constant 0 : i32
    %c0_i32_1 = arith.constant 0 : i32
    return %c0_i32, %c0_i32_0 : i32, i32
  }
  func.func @transform_2(%arg0: i32) -> (i32, i32) {
    %c0_i32 = arith.constant 0 : i32
    %c0_i32_0 = arith.constant 0 : i32
    %c0_i32_1 = arith.constant 0 : i32
    return %c0_i32, %c0_i32_0 : i32, i32
  }
  func.func @transform_3(%arg0: i32) -> (i32, i32) {
    %c0_i32 = arith.constant 0 : i32
    %c0_i32_0 = arith.constant 0 : i32
    %c0_i32_1 = arith.constant 0 : i32
    return %c0_i32, %c0_i32_0 : i32, i32
  }
  func.func @transform_4(%arg0: i32) -> (i32, i32) {
    %c0_i32 = arith.constant 0 : i32
    %c0_i32_0 = arith.constant 0 : i32
    return %c0_i32, %arg0 : i32, i32
  }
}

</mosaic_0001>

<llo_original>
// kernel: tpu_custom_call.1
$region0: #{tpu_custom_call.1}
  #allocation0 [shape = 'u32[]', space=smem, size = 0x4, offset = 0x4, fixed_abs, tag = 'smem constant byte address 0x4 - core index']
  #allocation1 [shape = 'u32[144,128]{1,0:T(1,128)}', space=vmem, size = 0x12000, scoped, tag = 'internal scratch']
  #allocation2 [shape = 'f32[32,128]{1,0:T(8,128)}', space=vmem, size = 0x4000, scoped, tag = 'scratch operand']
  %s0 = inlined_call_operand.hbm [shape: f32[32,48], index: 0, kind: input, shape index: {}]
  %s1 = inlined_call_operand.vmem [shape: f32[48,128], index: 1, kind: input, shape index: {}]
  %s2 = inlined_call_operand.hbm [shape: f32[32,32], index: 2, kind: input, shape index: {}]
  %s3 = inlined_call_operand.vmem [shape: f32[64,1], index: 3, kind: input, shape index: {}]
  %s4 = inlined_call_operand.hbm [shape: f32[32,128], index: 4, kind: output, shape index: {}]
  %s5 = sld [smem:[#allocation0]]
  $region34: #{tpu_custom_call.1} parent=0
    _
  %s7 = ssub.s32 1, %s5
  %s8 = scalar_select 0, %s7, %s5
  $region1: #{tpu_custom_call.1} parent=0
    #allocation3 [shape = 'u8[16384]{0}', space=vmem, size = 0x4000, scoped, tag = 'input window, operand 0, single buffered']
    #allocation4 [shape = 's32[1]{0}', space=sflag, size = 0x4, scoped, tag = 'scoped memory for tpu_custom_call.1']
    #allocation5 [shape = 's32[1]{0}', space=sflag, size = 0x4, scoped, tag = 'scoped memory for tpu_custom_call.1']
    #allocation6 [shape = 'u8[16384]{0}', space=vmem, size = 0x4000, scoped, tag = 'input window, operand 2, single buffered']
    #allocation7 [shape = 's32[1]{0}', space=sflag, size = 0x4, scoped, tag = 'scoped memory for tpu_custom_call.1']
    #allocation8 [shape = 'u8[16384]{0}', space=vmem, size = 0x4000, scoped, tag = 'output window, operand 0, single buffered']
    %9 = vsyncpa [#allocation4], 0
    %10 = vsyncpa [#allocation7], 0
    %11 = vsyncpa [#allocation5], 0
    // Predicated region
    $region2: #{tpu_custom_call.1} parent=1 // pred_check
      _
    $region3: #{tpu_custom_call.1} parent=1 // pred_check_branch
      %13 = sbr.rel (0) target = $region5
    $region4: #{tpu_custom_call.1} parent=1 // pred_region
      %s15 = ssub.s32 512, 512
      %16 = vsyncadd [#allocation4], %s15
      %s17 = sshll.u32 [#allocation3], 4
      %s18 = int_to_ptr.vmem [resolvable:$true] %s17
      %23 = dma.hbm_to_vmem [thread:$0]  %s0, 512, %s18, [#allocation4], 128, 128, 8
    $region5: #{tpu_custom_call.1} parent=1 // pred_fallthru
      _
    // Predicated region
    $region6: #{tpu_custom_call.1} parent=1 // pred_check
      _
    $region7: #{tpu_custom_call.1} parent=1 // pred_check_branch
      %25 = sbr.rel (0) target = $region9
    $region8: #{tpu_custom_call.1} parent=1 // pred_region
      _
    $region9: #{tpu_custom_call.1} parent=1 // pred_fallthru
      _
    // Predicated region
    $region10: #{tpu_custom_call.1} parent=1 // pred_check
      _
    $region11: #{tpu_custom_call.1} parent=1 // pred_check_branch
      %27 = sbr.rel (0) target = $region13
    $region12: #{tpu_custom_call.1} parent=1 // pred_region
      %s29 = ssub.s32 512, 512
      %30 = vsyncadd [#allocation7], %s29
      %s31 = sshll.u32 [#allocation6], 4
      %s32 = int_to_ptr.vmem [resolvable:$true] %s31
      %37 = dma.hbm_to_vmem [thread:$0]  %s2, 512, %s32, [#allocation7], 128, 128, 8
    $region13: #{tpu_custom_call.1} parent=1 // pred_fallthru
      _
    // Predicated region
    $region14: #{tpu_custom_call.1} parent=1 // pred_check
      _
    $region15: #{tpu_custom_call.1} parent=1 // pred_check_branch
      %39 = sbr.rel (0) target = $region17
    $region16: #{tpu_custom_call.1} parent=1 // pred_region
      _
    $region17: #{tpu_custom_call.1} parent=1 // pred_fallthru
      _
    // Predicated region
    $region18: #{tpu_custom_call.1} parent=1 // pred_check
      _
    $region19: #{tpu_custom_call.1} parent=1 // pred_check_branch
      %41 = sbr.rel (0) target = $region21
    $region20: #{tpu_custom_call.1} parent=1 // pred_region
      %42 = dma.done [#allocation4], 512
    $region21: #{tpu_custom_call.1} parent=1 // pred_fallthru
      _
    // Predicated region
    $region22: #{tpu_custom_call.1} parent=1 // pred_check
      _
    $region23: #{tpu_custom_call.1} parent=1 // pred_check_branch
      %44 = sbr.rel (0) target = $region25
    $region24: #{tpu_custom_call.1} parent=1 // pred_region
      %45 = dma.done [#allocation7], 512
    $region25: #{tpu_custom_call.1} parent=1 // pred_fallthru
      _
    %v46 = vld [vmem:[#allocation6] sm:$0xff]
    %v47 = vld [vmem:[#allocation6 + $0x8] sm:$0xff]
    %v48 = vld [vmem:[#allocation6 + $0x10] sm:$0xff]
    %v49 = vld [vmem:[#allocation6 + $0x18] sm:$0xff]
    %v50 = vld [vmem:[#allocation3] sm:$0xff]
    %v51 = vld [vmem:[#allocation3 + $0x8] sm:$0xff]
    %v52 = vld [vmem:[#allocation3 + $0x10] sm:$0xff]
    %v53 = vld [vmem:[#allocation3 + $0x18] sm:$0xff]
    %vm54 = vcmask 261120
    %v56 = vsel %vm54, %v46, 0
    %v59 = vsel %vm54, %v47, 0
    %v62 = vsel %vm54, %v48, 0
    %v65 = vsel %vm54, %v49, 0
    %67 = vmatprep.subr.mxu0 0.0
    %68 = vmatpush1.msra.mxu0 %v50
    %69 = vmatprep.subr.mxu0 0.0
    %70 = vmatpush1.msra.mxu0 %v51
    %71 = vmatprep.subr.mxu0 0.0
    %72 = vmatpush1.msra.mxu0 %v52
    %73 = vmatprep.subr.mxu0 0.0
    %74 = vmatpush1.msra.mxu0 %v53
    %75 = vmatprep.subr.mxu0 0.0
    %76 = vmatpush1.msra.mxu0 0.0
    %77 = vmatprep.subr.mxu0 0.0
    %78 = vmatpush1.msra.mxu0 0.0
    %79 = vmatprep.subr.mxu0 0.0
    %80 = vmatpush1.msra.mxu0 0.0
    %81 = vmatprep.subr.mxu0 0.0
    %82 = vmatpush1.msra.mxu0 0.0
    %83 = vmatprep.subr.mxu0 0.0
    %84 = vmatpush1.msra.mxu0 0.0
    %85 = vmatprep.subr.mxu0 0.0
    %86 = vmatpush1.msra.mxu0 0.0
    %87 = vmatprep.subr.mxu0 0.0
    %88 = vmatpush1.msra.mxu0 0.0
    %89 = vmatprep.subr.mxu0 0.0
    %90 = vmatpush1.msra.mxu0 0.0
    %91 = vmatprep.subr.mxu0 0.0
    %92 = vmatpush1.msra.mxu0 0.0
    %93 = vmatprep.subr.mxu0 0.0
    %94 = vmatpush1.msra.mxu0 0.0
    %95 = vmatprep.subr.mxu0 0.0
    %96 = vmatpush1.msra.mxu0 0.0
    %97 = vmatprep.subr.mxu0 0.0
    %98 = vmatpush1.msra.mxu0 0.0
    %99 = vmatprep.subr.mxu0 0.0
    %100 = vmatpush1.msra.mxu0 0.0
    %101 = vmatprep.subr.mxu0 0.0
    %102 = vmatpush1.msra.mxu0 0.0
    %103 = vmatprep.subr.mxu0 0.0
    %104 = vmatpush1.msra.mxu0 0.0
    %105 = vmatprep.subr.mxu0 0.0
    %106 = vmatpush1.msra.mxu0 0.0
    %107 = vmatprep.subr.mxu0 0.0
    %108 = vmatpush1.msra.mxu0 0.0
    %109 = vmatprep.subr.mxu0 0.0
    %110 = vmatpush1.msra.mxu0 0.0
    %111 = vmatprep.subr.mxu0 0.0
    %112 = vmatpush1.msra.mxu0 0.0
    %113 = vmatprep.subr.mxu0 0.0
    %114 = vmatpush1.msra.mxu0 0.0
    %115 = vmatprep.subr.mxu0 0.0
    %116 = vmatpush1.msra.mxu0 0.0
    %117 = vmatprep.subr.mxu0 0.0
    %118 = vmatpush1.msra.mxu0 0.0
    %119 = vmatprep.subr.mxu0 0.0
    %120 = vmatpush1.msra.mxu0 0.0
    %121 = vmatprep.subr.mxu0 0.0
    %122 = vmatpush1.msra.mxu0 0.0
    %123 = vmatprep.subr.mxu0 0.0
    %124 = vmatpush1.msra.mxu0 0.0
    %125 = vmatprep.subr.mxu0 0.0
    %126 = vmatpush1.msra.mxu0 0.0
    %127 = vmatprep.subr.mxu0 0.0
    %128 = vmatpush1.msra.mxu0 0.0
    %129 = vmatprep.subr.mxu0 0.0
    %130 = vmatpush1.msra.mxu0 0.0
    %131 = vmatprep.mubr.f32.mxu0 0.0
    %132 = vmatmul.mubr.f32.gmra.mrb[0].mxu0 %v56
    %v133 = vpop.f32.mrb[0].mxu0
    %v134 = vadd.f32 0.0, %v133
    %v135 = vpop.f32.mrb[0].mxu0
    %136 = vmatprep.mubr.f32.mxu0 0.0
    %137 = vmatmul.mubr.f32.gmra.mrb[0].mxu0 %v59
    %v138 = vpop.f32.mrb[0].mxu0
    %v139 = vadd.f32 0.0, %v138
    %v140 = vpop.f32.mrb[0].mxu0
    %141 = vmatprep.mubr.f32.mxu0 0.0
    %142 = vmatmul.mubr.f32.gmra.mrb[0].mxu0 %v62
    %v143 = vpop.f32.mrb[0].mxu0
    %v144 = vadd.f32 0.0, %v143
    %v145 = vpop.f32.mrb[0].mxu0
    %146 = vmatprep.mubr.f32.mxu0 0.0
    %147 = vmatmul.mubr.f32.gmra.mrb[0].mxu0 %v65
    %v148 = vpop.f32.mrb[0].mxu0
    %v149 = vadd.f32 0.0, %v148
    %v150 = vpop.f32.mrb[0].mxu0
    %151 = vdwg.mxu0
    %v152 = vld [vmem:[%s1] sm:$0xff]
    %v153 = vld [vmem:[%s1 + $0x8] sm:$0xff]
    %v154 = vld [vmem:[%s1 + $0x10] sm:$0xff]
    %v155 = vld [vmem:[%s1 + $0x18] sm:$0xff]
    %v156 = vld [vmem:[%s1 + $0x20] sm:$0xff]
    %v157 = vld [vmem:[%s1 + $0x28] sm:$0xff]
    %vm158 = vcmask 392192
    %v160 = vsel %vm158, %v134, 0
    %v163 = vsel %vm158, %v139, 0
    %v166 = vsel %vm158, %v144, 0
    %v169 = vsel %vm158, %v149, 0
    %171 = vmatprep.subr.mxu0 0.0
    %172 = vmatpush1.msra.mxu0 %v152
    %173 = vmatprep.subr.mxu0 0.0
    %174 = vmatpush1.msra.mxu0 %v153
    %175 = vmatprep.subr.mxu0 0.0
    %176 = vmatpush1.msra.mxu0 %v154
    %177 = vmatprep.subr.mxu0 0.0
    %178 = vmatpush1.msra.mxu0 %v155
    %179 = vmatprep.subr.mxu0 0.0
    %180 = vmatpush1.msra.mxu0 %v156
    %181 = vmatprep.subr.mxu0 0.0
    %182 = vmatpush1.msra.mxu0 %v157
    %183 = vmatprep.subr.mxu0 0.0
    %184 = vmatpush1.msra.mxu0 0.0
    %185 = vmatprep.subr.mxu0 0.0
    %186 = vmatpush1.msra.mxu0 0.0
    %187 = vmatprep.subr.mxu0 0.0
    %188 = vmatpush1.msra.mxu0 0.0
    %189 = vmatprep.subr.mxu0 0.0
    %190 = vmatpush1.msra.mxu0 0.0
    %191 = vmatprep.subr.mxu0 0.0
    %192 = vmatpush1.msra.mxu0 0.0
    %193 = vmatprep.subr.mxu0 0.0
    %194 = vmatpush1.msra.mxu0 0.0
    %195 = vmatprep.subr.mxu0 0.0
    %196 = vmatpush1.msra.mxu0 0.0
    %197 = vmatprep.subr.mxu0 0.0
    %198 = vmatpush1.msra.mxu0 0.0
    %199 = vmatprep.subr.mxu0 0.0
    %200 = vmatpush1.msra.mxu0 0.0
    %201 = vmatprep.subr.mxu0 0.0
    %202 = vmatpush1.msra.mxu0 0.0
    %203 = vmatprep.subr.mxu0 0.0
    %204 = vmatpush1.msra.mxu0 0.0
    %205 = vmatprep.subr.mxu0 0.0
    %206 = vmatpush1.msra.mxu0 0.0
    %207 = vmatprep.subr.mxu0 0.0
    %208 = vmatpush1.msra.mxu0 0.0
    %209 = vmatprep.subr.mxu0 0.0
    %210 = vmatpush1.msra.mxu0 0.0
    %211 = vmatprep.subr.mxu0 0.0
    %212 = vmatpush1.msra.mxu0 0.0
    %213 = vmatprep.subr.mxu0 0.0
    %214 = vmatpush1.msra.mxu0 0.0
    %215 = vmatprep.subr.mxu0 0.0
    %216 = vmatpush1.msra.mxu0 0.0
    %217 = vmatprep.subr.mxu0 0.0
    %218 = vmatpush1.msra.mxu0 0.0
    %219 = vmatprep.subr.mxu0 0.0
    %220 = vmatpush1.msra.mxu0 0.0
    %221 = vmatprep.subr.mxu0 0.0
    %222 = vmatpush1.msra.mxu0 0.0
    %223 = vmatprep.subr.mxu0 0.0
    %224 = vmatpush1.msra.mxu0 0.0
    %225 = vmatprep.subr.mxu0 0.0
    %226 = vmatpush1.msra.mxu0 0.0
    %227 = vmatprep.subr.mxu0 0.0
    %228 = vmatpush1.msra.mxu0 0.0
    %229 = vmatprep.subr.mxu0 0.0
    %230 = vmatpush1.msra.mxu0 0.0
    %231 = vmatprep.subr.mxu0 0.0
    %232 = vmatpush1.msra.mxu0 0.0
    %233 = vmatprep.subr.mxu0 0.0
    %234 = vmatpush1.msra.mxu0 0.0
    %235 = vmatprep.mubr.f32.mxu0 0.0
    %236 = vmatmul.mubr.f32.gmra.mrb[0].mxu0 %v160
    %v237 = vpop.f32.mrb[0].mxu0
    %v238 = vadd.f32 0.0, %v237
    %v239 = vpop.f32.mrb[0].mxu0
    %240 = vmatprep.mubr.f32.mxu0 0.0
    %241 = vmatmul.mubr.f32.gmra.mrb[0].mxu0 %v163
    %v242 = vpop.f32.mrb[0].mxu0
    %v243 = vadd.f32 0.0, %v242
    %v244 = vpop.f32.mrb[0].mxu0
    %245 = vmatprep.mubr.f32.mxu0 0.0
    %246 = vmatmul.mubr.f32.gmra.mrb[0].mxu0 %v166
    %v247 = vpop.f32.mrb[0].mxu0
    %v248 = vadd.f32 0.0, %v247
    %v249 = vpop.f32.mrb[0].mxu0
    %250 = vmatprep.mubr.f32.mxu0 0.0
    %251 = vmatmul.mubr.f32.gmra.mrb[0].mxu0 %v169
    %v252 = vpop.f32.mrb[0].mxu0
    %v253 = vadd.f32 0.0, %v252
    %v254 = vpop.f32.mrb[0].mxu0
    %255 = vdwg.mxu0
    %256 = vst [vmem:[#allocation2] sm:$0xff] %v238
    %257 = vst [vmem:[#allocation2 + $0x8] sm:$0xff] %v243
    %258 = vst [vmem:[#allocation2 + $0x10] sm:$0xff] %v248
    %259 = vst [vmem:[#allocation2 + $0x18] sm:$0xff] %v253
    %v260 = vld [vmem:[#allocation2] sm:$0x1]
    %vm261 = vcmp.ge.f32.partialorder %v260, 0.25
    %v262 = vsel %vm261, 1, 0
    %v263 = vcvt.s32.f32 %v262
    %264 = vst [vmem:[#allocation8] sm:$0x1] %v263
    %v265 = vld [vmem:[%s3 + $0x20] sm:$0xff]
    %v266 = vld [vmem:[%s3 + $0x28] sm:$0xff]
    %v267 = vld [vmem:[%s3 + $0x30] sm:$0xff]
    %v268 = vld [vmem:[%s3 + $0x38] sm:$0xff]
    %v269 = vld [vmem:[#allocation2] sm:$0xff]
    %v270 = vld [vmem:[#allocation2 + $0x8] sm:$0xff]
    %v271 = vld [vmem:[#allocation2 + $0x10] sm:$0xff]
    %v272 = vld [vmem:[#allocation2 + $0x18] sm:$0xff]
    %274 = vset.pattern.permute.xlu0 0
    %275 = vperm.xlu0 %274, %v265
    %v276 = vpop.permute.xlu0 %275
    %279 = vset.pattern.permute.xlu0 0
    %280 = vperm.xlu0 %279, %v266
    %v281 = vpop.permute.xlu0 %280
    %284 = vset.pattern.permute.xlu0 0
    %285 = vperm.xlu0 %284, %v267
    %v286 = vpop.permute.xlu0 %285
    %289 = vset.pattern.permute.xlu0 0
    %290 = vperm.xlu0 %289, %v268
    %v291 = vpop.permute.xlu0 %290
    %v293 = vlaneseq
    %v294 = vshrl.u32 %v293, 7
    %v295 = vsub.s32 0, %v294
    %v296 = vrot.slane %v263, %v295
    %v297 = vmul.f32 %v276, %v296
    %v298 = vmul.f32 %v281, %v296
    %v299 = vmul.f32 %v286, %v296
    %v300 = vmul.f32 %v291, %v296
    %v301 = vadd.f32 %v269, %v297
    %v302 = vadd.f32 %v270, %v298
    %v303 = vadd.f32 %v271, %v299
    %v304 = vadd.f32 %v272, %v300
    %305 = vst [vmem:[#allocation2] sm:$0xff] %v301
    %306 = vst [vmem:[#allocation2 + $0x8] sm:$0xff] %v302
    %307 = vst [vmem:[#allocation2 + $0x10] sm:$0xff] %v303
    %308 = vst [vmem:[#allocation2 + $0x18] sm:$0xff] %v304
    %v309 = vld [vmem:[#allocation2 + $0x1] sm:$0x1]
    %vm310 = vcmp.ge.f32.partialorder %v309, 0.25
    %v311 = vsel %vm310, 1, 0
    %v312 = vcvt.s32.f32 %v311
    %313 = vst [vmem:[#allocation8 + $0x1] sm:$0x1] %v312
    %v314 = vld [vmem:[%s3 + $0x1f] sm:$0xff]
    %v315 = vld [vmem:[%s3 + $0x27] sm:$0xff]
    %v316 = vld [vmem:[%s3 + $0x2f] sm:$0xff]
    %v317 = vld [vmem:[%s3 + $0x37] sm:$0xff]
    %v318 = vld [vmem:[#allocation2] sm:$0xff]
    %v319 = vld [vmem:[#allocation2 + $0x8] sm:$0xff]
    %v320 = vld [vmem:[#allocation2 + $0x10] sm:$0xff]
    %v321 = vld [vmem:[#allocation2 + $0x18] sm:$0xff]
    %323 = vset.pattern.permute.xlu0 0
    %324 = vperm.xlu0 %323, %v314
    %v325 = vpop.permute.xlu0 %324
    %328 = vset.pattern.permute.xlu0 0
    %329 = vperm.xlu0 %328, %v315
    %v330 = vpop.permute.xlu0 %329
    %333 = vset.pattern.permute.xlu0 0
    %334 = vperm.xlu0 %333, %v316
    %v335 = vpop.permute.xlu0 %334
    %338 = vset.pattern.permute.xlu0 0
    %339 = vperm.xlu0 %338, %v317
    %v340 = vpop.permute.xlu0 %339
    %v342 = vlaneseq
    %v343 = vshrl.u32 %v342, 7
    %v344 = vsub.s32 0, %v343
    %v345 = vrot.slane %v312, %v344
    %v346 = vmul.f32 %v325, %v345
    %v347 = vmul.f32 %v330, %v345
    %v348 = vmul.f32 %v335, %v345
    %v349 = vmul.f32 %v340, %v345
    %v350 = vadd.f32 %v318, %v346
    %v351 = vadd.f32 %v319, %v347
    %v352 = vadd.f32 %v320, %v348
    %v353 = vadd.f32 %v321, %v349
    %354 = vst [vmem:[#allocation2] sm:$0xff] %v350
    %355 = vst [vmem:[#allocation2 + $0x8] sm:$0xff] %v351
    %356 = vst [vmem:[#allocation2 + $0x10] sm:$0xff] %v352
    %357 = vst [vmem:[#allocation2 + $0x18] sm:$0xff] %v353
    %v358 = vld [vmem:[#allocation2 + $0x2] sm:$0x1]
    %vm359 = vcmp.ge.f32.partialorder %v358, 0.25
    %v360 = vsel %vm359, 1, 0
    %v361 = vcvt.s32.f32 %v360
    %362 = vst [vmem:[#allocation8 + $0x2] sm:$0x1] %v361
    %v363 = vld [vmem:[%s3 + $0x1e] sm:$0xff]
    %v364 = vld [vmem:[%s3 + $0x26] sm:$0xff]
    %v365 = vld [vmem:[%s3 + $0x2e] sm:$0xff]
    %v366 = vld [vmem:[%s3 + $0x36] sm:$0xff]
    %v367 = vld [vmem:[#allocation2] sm:$0xff]
    %v368 = vld [vmem:[#allocation2 + $0x8] sm:$0xff]
    %v369 = vld [vmem:[#allocation2 + $0x10] sm:$0xff]
    %v370 = vld [vmem:[#allocation2 + $0x18] sm:$0xff]
    %372 = vset.pattern.permute.xlu0 0
    %373 = vperm.xlu0 %372, %v363
    %v374 = vpop.permute.xlu0 %373
    %377 = vset.pattern.permute.xlu0 0
    %378 = vperm.xlu0 %377, %v364
    %v379 = vpop.permute.xlu0 %378
    %382 = vset.pattern.permute.xlu0 0
    %383 = vperm.xlu0 %382, %v365
    %v384 = vpop.permute.xlu0 %383
    %387 = vset.pattern.permute.xlu0 0
    %388 = vperm.xlu0 %387, %v366
    %v389 = vpop.permute.xlu0 %388
    %v391 = vlaneseq
    %v392 = vshrl.u32 %v391, 7
    %v393 = vsub.s32 0, %v392
    %v394 = vrot.slane %v361, %v393
    %v395 = vmul.f32 %v374, %v394
    %v396 = vmul.f32 %v379, %v394
    %v397 = vmul.f32 %v384, %v394
    %v398 = vmul.f32 %v389, %v394
    %v399 = vadd.f32 %v367, %v395
    %v400 = vadd.f32 %v368, %v396
    %v401 = vadd.f32 %v369, %v397
    %v402 = vadd.f32 %v370, %v398
    %403 = vst [vmem:[#allocation2] sm:$0xff] %v399
    %404 = vst [vmem:[#allocation2 + $0x8] sm:$0xff] %v400
    %405 = vst [vmem:[#allocation2 + $0x10] sm:$0xff] %v401
    %406 = vst [vmem:[#allocation2 + $0x18] sm:$0xff] %v402
    %v407 = vld [vmem:[#allocation2 + $0x3] sm:$0x1]
    %vm408 = vcmp.ge.f32.partialorder %v407, 0.25
    %v409 = vsel %vm408, 1, 0
    %v410 = vcvt.s32.f32 %v409
    %411 = vst [vmem:[#allocation8 + $0x3] sm:$0x1] %v410
    %v412 = vld [vmem:[%s3 + $0x1d] sm:$0xff]
    %v413 = vld [vmem:[%s3 + $0x25] sm:$0xff]
    %v414 = vld [vmem:[%s3 + $0x2d] sm:$0xff]
    %v415 = vld [vmem:[%s3 + $0x35] sm:$0xff]
    %v416 = vld [vmem:[#allocation2] sm:$0xff]
    %v417 = vld [vmem:[#allocation2 + $0x8] sm:$0xff]
    %v418 = vld [vmem:[#allocation2 + $0x10] sm:$0xff]
    %v419 = vld [vmem:[#allocation2 + $0x18] sm:$0xff]
    %421 = vset.pattern.permute.xlu0 0
    %422 = vperm.xlu0 %421, %v412
    %v423 = vpop.permute.xlu0 %422
    %426 = vset.pattern.permute.xlu0 0
    %427 = vperm.xlu0 %426, %v413
    %v428 = vpop.permute.xlu0 %427
    %431 = vset.pattern.permute.xlu0 0
    %432 = vperm.xlu0 %431, %v414
    %v433 = vpop.permute.xlu0 %432
    %436 = vset.pattern.permute.xlu0 0
    %437 = vperm.xlu0 %436, %v415
    %v438 = vpop.permute.xlu0 %437
    %v440 = vlaneseq
    %v441 = vshrl.u32 %v440, 7
    %v442 = vsub.s32 0, %v441
    %v443 = vrot.slane %v410, %v442
    %v444 = vmul.f32 %v423, %v443
    %v445 = vmul.f32 %v428, %v443
    %v446 = vmul.f32 %v433, %v443
    %v447 = vmul.f32 %v438, %v443
    %v448 = vadd.f32 %v416, %v444
    %v449 = vadd.f32 %v417, %v445
    %v450 = vadd.f32 %v418, %v446
    %v451 = vadd.f32 %v419, %v447
    %452 = vst [vmem:[#allocation2] sm:$0xff] %v448
    %453 = vst [vmem:[#allocation2 + $0x8] sm:$0xff] %v449
    %454 = vst [vmem:[#allocation2 + $0x10] sm:$0xff] %v450
    %455 = vst [vmem:[#allocation2 + $0x18] sm:$0xff] %v451
    %v456 = vld [vmem:[#allocation2 + $0x4] sm:$0x1]
    %vm457 = vcmp.ge.f32.partialorder %v456, 0.25
    %v458 = vsel %vm457, 1, 0
    %v459 = vcvt.s32.f32 %v458
    %460 = vst [vmem:[#allocation8 + $0x4] sm:$0x1] %v459
    %v461 = vld [vmem:[%s3 + $0x1c] sm:$0xff]
    %v462 = vld [vmem:[%s3 + $0x24] sm:$0xff]
    %v463 = vld [vmem:[%s3 + $0x2c] sm:$0xff]
    %v464 = vld [vmem:[%s3 + $0x34] sm:$0xff]
    %v465 = vld [vmem:[#allocation2] sm:$0xff]
    %v466 = vld [vmem:[#allocation2 + $0x8] sm:$0xff]
    %v467 = vld [vmem:[#allocation2 + $0x10] sm:$0xff]
    %v468 = vld [vmem:[#allocation2 + $0x18] sm:$0xff]
    %470 = vset.pattern.permute.xlu0 0
    %471 = vperm.xlu0 %470, %v461
    %v472 = vpop.permute.xlu0 %471
    %475 = vset.pattern.permute.xlu0 0
    %476 = vperm.xlu0 %475, %v462
    %v477 = vpop.permute.xlu0 %476
    %480 = vset.pattern.permute.xlu0 0
    %481 = vperm.xlu0 %480, %v463
    %v482 = vpop.permute.xlu0 %481
    %485 = vset.pattern.permute.xlu0 0
    %486 = vperm.xlu0 %485, %v464
    %v487 = vpop.permute.xlu0 %486
    %v489 = vlaneseq
    %v490 = vshrl.u32 %v489, 7
    %v491 = vsub.s32 0, %v490
    %v492 = vrot.slane %v459, %v491
    %v493 = vmul.f32 %v472, %v492
    %v494 = vmul.f32 %v477, %v492
    %v495 = vmul.f32 %v482, %v492
    %v496 = vmul.f32 %v487, %v492
    %v497 = vadd.f32 %v465, %v493
    %v498 = vadd.f32 %v466, %v494
    %v499 = vadd.f32 %v467, %v495
    %v500 = vadd.f32 %v468, %v496
    %501 = vst [vmem:[#allocation2] sm:$0xff] %v497
    %502 = vst [vmem:[#allocation2 + $0x8] sm:$0xff] %v498
    %503 = vst [vmem:[#allocation2 + $0x10] sm:$0xff] %v499
    %504 = vst [vmem:[#allocation2 + $0x18] sm:$0xff] %v500
    %v505 = vld [vmem:[#allocation2 + $0x5] sm:$0x1]
    %vm506 = vcmp.ge.f32.partialorder %v505, 0.25
    %v507 = vsel %vm506, 1, 0
    %v508 = vcvt.s32.f32 %v507
    %509 = vst [vmem:[#allocation8 + $0x5] sm:$0x1] %v508
    %v510 = vld [vmem:[%s3 + $0x1b] sm:$0xff]
    %v511 = vld [vmem:[%s3 + $0x23] sm:$0xff]
    %v512 = vld [vmem:[%s3 + $0x2b] sm:$0xff]
    %v513 = vld [vmem:[%s3 + $0x33] sm:$0xff]
    %v514 = vld [vmem:[#allocation2] sm:$0xff]
    %v515 = vld [vmem:[#allocation2 + $0x8] sm:$0xff]
    %v516 = vld [vmem:[#allocation2 + $0x10] sm:$0xff]
    %v517 = vld [vmem:[#allocation2 + $0x18] sm:$0xff]
    %519 = vset.pattern.permute.xlu0 0
    %520 = vperm.xlu0 %519, %v510
    %v521 = vpop.permute.xlu0 %520
    %524 = vset.pattern.permute.xlu0 0
    %525 = vperm.xlu0 %524, %v511
    %v526 = vpop.permute.xlu0 %525
    %529 = vset.pattern.permute.xlu0 0
    %530 = vperm.xlu0 %529, %v512
    %v531 = vpop.permute.xlu0 %530
    %534 = vset.pattern.permute.xlu0 0
    %535 = vperm.xlu0 %534, %v513
    %v536 = vpop.permute.xlu0 %535
    %v538 = vlaneseq
    %v539 = vshrl.u32 %v538, 7
    %v540 = vsub.s32 0, %v539
    %v541 = vrot.slane %v508, %v540
    %v542 = vmul.f32 %v521, %v541
    %v543 = vmul.f32 %v526, %v541
    %v544 = vmul.f32 %v531, %v541
    %v545 = vmul.f32 %v536, %v541
    %v546 = vadd.f32 %v514, %v542
    %v547 = vadd.f32 %v515, %v543
    %v548 = vadd.f32 %v516, %v544
    %v549 = vadd.f32 %v517, %v545
    %550 = vst [vmem:[#allocation2] sm:$0xff] %v546
    %551 = vst [vmem:[#allocation2 + $0x8] sm:$0xff] %v547
    %552 = vst [vmem:[#allocation2 + $0x10] sm:$0xff] %v548
    %553 = vst [vmem:[#allocation2 + $0x18] sm:$0xff] %v549
    %v554 = vld [vmem:[#allocation2 + $0x6] sm:$0x1]
    %vm555 = vcmp.ge.f32.partialorder %v554, 0.25
    %v556 = vsel %vm555, 1, 0
    %v557 = vcvt.s32.f32 %v556
    %558 = vst [vmem:[#allocation8 + $0x6] sm:$0x1] %v557
    %v559 = vld [vmem:[%s3 + $0x1a] sm:$0xff]
    %v560 = vld [vmem:[%s3 + $0x22] sm:$0xff]
    %v561 = vld [vmem:[%s3 + $0x2a] sm:$0xff]
    %v562 = vld [vmem:[%s3 + $0x32] sm:$0xff]
    %v563 = vld [vmem:[#allocation2] sm:$0xff]
    %v564 = vld [vmem:[#allocation2 + $0x8] sm:$0xff]
    %v565 = vld [vmem:[#allocation2 + $0x10] sm:$0xff]
    %v566 = vld [vmem:[#allocation2 + $0x18] sm:$0xff]
    %568 = vset.pattern.permute.xlu0 0
    %569 = vperm.xlu0 %568, %v559
    %v570 = vpop.permute.xlu0 %569
    %573 = vset.pattern.permute.xlu0 0
    %574 = vperm.xlu0 %573, %v560
    %v575 = vpop.permute.xlu0 %574
    %578 = vset.pattern.permute.xlu0 0
    %579 = vperm.xlu0 %578, %v561
    %v580 = vpop.permute.xlu0 %579
    %583 = vset.pattern.permute.xlu0 0
    %584 = vperm.xlu0 %583, %v562
    %v585 = vpop.permute.xlu0 %584
    %v587 = vlaneseq
    %v588 = vshrl.u32 %v587, 7
    %v589 = vsub.s32 0, %v588
    %v590 = vrot.slane %v557, %v589
    %v591 = vmul.f32 %v570, %v590
    %v592 = vmul.f32 %v575, %v590
    %v593 = vmul.f32 %v580, %v590
    %v594 = vmul.f32 %v585, %v590
    %v595 = vadd.f32 %v563, %v591
    %v596 = vadd.f32 %v564, %v592
    %v597 = vadd.f32 %v565, %v593
    %v598 = vadd.f32 %v566, %v594
    %599 = vst [vmem:[#allocation2] sm:$0xff] %v595
    %600 = vst [vmem:[#allocation2 + $0x8] sm:$0xff] %v596
    %601 = vst [vmem:[#allocation2 + $0x10] sm:$0xff] %v597
    %602 = vst [vmem:[#allocation2 + $0x18] sm:$0xff] %v598
    %v603 = vld [vmem:[#allocation2 + $0x7] sm:$0x1]
    %vm604 = vcmp.ge.f32.partialorder %v603, 0.25
    %v605 = vsel %vm604, 1, 0
    %v606 = vcvt.s32.f32 %v605
    %607 = vst [vmem:[#allocation8 + $0x7] sm:$0x1] %v606
    %v608 = vld [vmem:[%s3 + $0x19] sm:$0xff]
    %v609 = vld [vmem:[%s3 + $0x21] sm:$0xff]
    %v610 = vld [vmem:[%s3 + $0x29] sm:$0xff]
    %v611 = vld [vmem:[%s3 + $0x31] sm:$0xff]
    %v612 = vld [vmem:[#allocation2] sm:$0xff]
    %v613 = vld [vmem:[#allocation2 + $0x8] sm:$0xff]
    %v614 = vld [vmem:[#allocation2 + $0x10] sm:$0xff]
    %v615 = vld [vmem:[#allocation2 + $0x18] sm:$0xff]
    %617 = vset.pattern.permute.xlu0 0
    %618 = vperm.xlu0 %617, %v608
    %v619 = vpop.permute.xlu0 %618
    %622 = vset.pattern.permute.xlu0 0
    %623 = vperm.xlu0 %622, %v609
    %v624 = vpop.permute.xlu0 %623
    %627 = vset.pattern.permute.xlu0 0
    %628 = vperm.xlu0 %627, %v610
    %v629 = vpop.permute.xlu0 %628
    %632 = vset.pattern.permute.xlu0 0
    %633 = vperm.xlu0 %632, %v611
    %v634 = vpop.permute.xlu0 %633
    %v636 = vlaneseq
    %v637 = vshrl.u32 %v636, 7
    %v638 = vsub.s32 0, %v637
    %v639 = vrot.slane %v606, %v638
    %v640 = vmul.f32 %v619, %v639
    %v641 = vmul.f32 %v624, %v639
    %v642 = vmul.f32 %v629, %v639
    %v643 = vmul.f32 %v634, %v639
    %v644 = vadd.f32 %v612, %v640
    %v645 = vadd.f32 %v613, %v641
    %v646 = vadd.f32 %v614, %v642
    %v647 = vadd.f32 %v615, %v643
    %648 = vst [vmem:[#allocation2] sm:$0xff] %v644
    %649 = vst [vmem:[#allocation2 + $0x8] sm:$0xff] %v645
    %650 = vst [vmem:[#allocation2 + $0x10] sm:$0xff] %v646
    %651 = vst [vmem:[#allocation2 + $0x18] sm:$0xff] %v647
    %v652 = vld [vmem:[#allocation2 + $0x8] sm:$0x1]
    %vm653 = vcmp.ge.f32.partialorder %v652, 0.25
    %v654 = vsel %vm653, 1, 0
    %v655 = vcvt.s32.f32 %v654
    %656 = vst [vmem:[#allocation8 + $0x8] sm:$0x1] %v655
    %v657 = vld [vmem:[%s3 + $0x18] sm:$0xff]
    %v658 = vld [vmem:[%s3 + $0x20] sm:$0xff]
    %v659 = vld [vmem:[%s3 + $0x28] sm:$0xff]
    %v660 = vld [vmem:[%s3 + $0x30] sm:$0xff]
    %v661 = vld [vmem:[#allocation2] sm:$0xff]
    %v662 = vld [vmem:[#allocation2 + $0x8] sm:$0xff]
    %v663 = vld [vmem:[#allocation2 + $0x10] sm:$0xff]
    %v664 = vld [vmem:[#allocation2 + $0x18] sm:$0xff]
    %666 = vset.pattern.permute.xlu0 0
    %667 = vperm.xlu0 %666, %v657
    %v668 = vpop.permute.xlu0 %667
    %671 = vset.pattern.permute.xlu0 0
    %672 = vperm.xlu0 %671, %v658
    %v673 = vpop.permute.xlu0 %672
    %676 = vset.pattern.permute.xlu0 0
    %677 = vperm.xlu0 %676, %v659
    %v678 = vpop.permute.xlu0 %677
    %681 = vset.pattern.permute.xlu0 0
    %682 = vperm.xlu0 %681, %v660
    %v683 = vpop.permute.xlu0 %682
    %v685 = vlaneseq
    %v686 = vshrl.u32 %v685, 7
    %v687 = vsub.s32 0, %v686
    %v688 = vrot.slane %v655, %v687
    %v689 = vmul.f32 %v668, %v688
    %v690 = vmul.f32 %v673, %v688
    %v691 = vmul.f32 %v678, %v688
    %v692 = vmul.f32 %v683, %v688
    %v693 = vadd.f32 %v661, %v689
    %v694 = vadd.f32 %v662, %v690
    %v695 = vadd.f32 %v663, %v691
    %v696 = vadd.f32 %v664, %v692
    %697 = vst [vmem:[#allocation2] sm:$0xff] %v693
    %698 = vst [vmem:[#allocation2 + $0x8] sm:$0xff] %v694
    %699 = vst [vmem:[#allocation2 + $0x10] sm:$0xff] %v695
    %700 = vst [vmem:[#allocation2 + $0x18] sm:$0xff] %v696
    %v701 = vld [vmem:[#allocation2 + $0x9] sm:$0x1]
    %vm702 = vcmp.ge.f32.partialorder %v701, 0.25
    %v703 = vsel %vm702, 1, 0
    %v704 = vcvt.s32.f32 %v703
    %705 = vst [vmem:[#allocation8 + $0x9] sm:$0x1] %v704
    %v706 = vld [vmem:[%s3 + $0x17] sm:$0xff]
    %v707 = vld [vmem:[%s3 + $0x1f] sm:$0xff]
    %v708 = vld [vmem:[%s3 + $0x27] sm:$0xff]
    %v709 = vld [vmem:[%s3 + $0x2f] sm:$0xff]
    %v710 = vld [vmem:[#allocation2] sm:$0xff]
    %v711 = vld [vmem:[#allocation2 + $0x8] sm:$0xff]
    %v712 = vld [vmem:[#allocation2 + $0x10] sm:$0xff]
    %v713 = vld [vmem:[#allocation2 + $0x18] sm:$0xff]
    %715 = vset.pattern.permute.xlu0 0
    %716 = vperm.xlu0 %715, %v706
    %v717 = vpop.permute.xlu0 %716
    %720 = vset.pattern.permute.xlu0 0
    %721 = vperm.xlu0 %720, %v707
    %v722 = vpop.permute.xlu0 %721
    %725 = vset.pattern.permute.xlu0 0
    %726 = vperm.xlu0 %725, %v708
    %v727 = vpop.permute.xlu0 %726
    %730 = vset.pattern.permute.xlu0 0
    %731 = vperm.xlu0 %730, %v709
    %v732 = vpop.permute.xlu0 %731
    %v734 = vlaneseq
    %v735 = vshrl.u32 %v734, 7
    %v736 = vsub.s32 0, %v735
    %v737 = vrot.slane %v704, %v736
    %v738 = vmul.f32 %v717, %v737
    %v739 = vmul.f32 %v722, %v737
    %v740 = vmul.f32 %v727, %v737
    %v741 = vmul.f32 %v732, %v737
    %v742 = vadd.f32 %v710, %v738
    %v743 = vadd.f32 %v711, %v739
    %v744 = vadd.f32 %v712, %v740
    %v745 = vadd.f32 %v713, %v741
    %746 = vst [vmem:[#allocation2] sm:$0xff] %v742
    %747 = vst [vmem:[#allocation2 + $0x8] sm:$0xff] %v743
    %748 = vst [vmem:[#allocation2 + $0x10] sm:$0xff] %v744
    %749 = vst [vmem:[#allocation2 + $0x18] sm:$0xff] %v745
    %v750 = vld [vmem:[#allocation2 + $0xa] sm:$0x1]
    %vm751 = vcmp.ge.f32.partialorder %v750, 0.25
    %v752 = vsel %vm751, 1, 0
    %v753 = vcvt.s32.f32 %v752
    %754 = vst [vmem:[#allocation8 + $0xa] sm:$0x1] %v753
    %v755 = vld [vmem:[%s3 + $0x16] sm:$0xff]
    %v756 = vld [vmem:[%s3 + $0x1e] sm:$0xff]
    %v757 = vld [vmem:[%s3 + $0x26] sm:$0xff]
    %v758 = vld [vmem:[%s3 + $0x2e] sm:$0xff]
    %v759 = vld [vmem:[#allocation2] sm:$0xff]
    %v760 = vld [vmem:[#allocation2 + $0x8] sm:$0xff]
    %v761 = vld [vmem:[#allocation2 + $0x10] sm:$0xff]
    %v762 = vld [vmem:[#allocation2 + $0x18] sm:$0xff]
    %764 = vset.pattern.permute.xlu0 0
    %765 = vperm.xlu0 %764, %v755
    %v766 = vpop.permute.xlu0 %765
    %769 = vset.pattern.permute.xlu0 0
    %770 = vperm.xlu0 %769, %v756
    %v771 = vpop.permute.xlu0 %770
    %774 = vset.pattern.permute.xlu0 0
    %775 = vperm.xlu0 %774, %v757
    %v776 = vpop.permute.xlu0 %775
    %779 = vset.pattern.permute.xlu0 0
    %780 = vperm.xlu0 %779, %v758
    %v781 = vpop.permute.xlu0 %780
    %v783 = vlaneseq
    %v784 = vshrl.u32 %v783, 7
    %v785 = vsub.s32 0, %v784
    %v786 = vrot.slane %v753, %v785
    %v787 = vmul.f32 %v766, %v786
    %v788 = vmul.f32 %v771, %v786
    %v789 = vmul.f32 %v776, %v786
    %v790 = vmul.f32 %v781, %v786
    %v791 = vadd.f32 %v759, %v787
    %v792 = vadd.f32 %v760, %v788
    %v793 = vadd.f32 %v761, %v789
    %v794 = vadd.f32 %v762, %v790
    %795 = vst [vmem:[#allocation2] sm:$0xff] %v791
    %796 = vst [vmem:[#allocation2 + $0x8] sm:$0xff] %v792
    %797 = vst [vmem:[#allocation2 + $0x10] sm:$0xff] %v793
    %798 = vst [vmem:[#allocation2 + $0x18] sm:$0xff] %v794
    %v799 = vld [vmem:[#allocation2 + $0xb] sm:$0x1]
    %vm800 = vcmp.ge.f32.partialorder %v799, 0.25
    %v801 = vsel %vm800, 1, 0
    %v802 = vcvt.s32.f32 %v801
    %803 = vst [vmem:[#allocation8 + $0xb] sm:$0x1] %v802
    %v804 = vld [vmem:[%s3 + $0x15] sm:$0xff]
    %v805 = vld [vmem:[%s3 + $0x1d] sm:$0xff]
    %v806 = vld [vmem:[%s3 + $0x25] sm:$0xff]
    %v807 = vld [vmem:[%s3 + $0x2d] sm:$0xff]
    %v808 = vld [vmem:[#allocation2] sm:$0xff]
    %v809 = vld [vmem:[#allocation2 + $0x8] sm:$0xff]
    %v810 = vld [vmem:[#allocation2 + $0x10] sm:$0xff]
    %v811 = vld [vmem:[#allocation2 + $0x18] sm:$0xff]
    %813 = vset.pattern.permute.xlu0 0
    %814 = vperm.xlu0 %813, %v804
    %v815 = vpop.permute.xlu0 %814
    %818 = vset.pattern.permute.xlu0 0
    %819 = vperm.xlu0 %818, %v805
    %v820 = vpop.permute.xlu0 %819
    %823 = vset.pattern.permute.xlu0 0
    %824 = vperm.xlu0 %823, %v806
    %v825 = vpop.permute.xlu0 %824
    %828 = vset.pattern.permute.xlu0 0
    %829 = vperm.xlu0 %828, %v807
    %v830 = vpop.permute.xlu0 %829
    %v832 = vlaneseq
    %v833 = vshrl.u32 %v832, 7
    %v834 = vsub.s32 0, %v833
    %v835 = vrot.slane %v802, %v834
    %v836 = vmul.f32 %v815, %v835
    %v837 = vmul.f32 %v820, %v835
    %v838 = vmul.f32 %v825, %v835
    %v839 = vmul.f32 %v830, %v835
    %v840 = vadd.f32 %v808, %v836
    %v841 = vadd.f32 %v809, %v837
    %v842 = vadd.f32 %v810, %v838
    %v843 = vadd.f32 %v811, %v839
    %844 = vst [vmem:[#allocation2] sm:$0xff] %v840
    %845 = vst [vmem:[#allocation2 + $0x8] sm:$0xff] %v841
    %846 = vst [vmem:[#allocation2 + $0x10] sm:$0xff] %v842
    %847 = vst [vmem:[#allocation2 + $0x18] sm:$0xff] %v843
    %v848 = vld [vmem:[#allocation2 + $0xc] sm:$0x1]
    %vm849 = vcmp.ge.f32.partialorder %v848, 0.25
    %v850 = vsel %vm849, 1, 0
    %v851 = vcvt.s32.f32 %v850
    %852 = vst [vmem:[#allocation8 + $0xc] sm:$0x1] %v851
    %v853 = vld [vmem:[%s3 + $0x14] sm:$0xff]
    %v854 = vld [vmem:[%s3 + $0x1c] sm:$0xff]
    %v855 = vld [vmem:[%s3 + $0x24] sm:$0xff]
    %v856 = vld [vmem:[%s3 + $0x2c] sm:$0xff]
    %v857 = vld [vmem:[#allocation2] sm:$0xff]
    %v858 = vld [vmem:[#allocation2 + $0x8] sm:$0xff]
    %v859 = vld [vmem:[#allocation2 + $0x10] sm:$0xff]
    %v860 = vld [vmem:[#allocation2 + $0x18] sm:$0xff]
    %862 = vset.pattern.permute.xlu0 0
    %863 = vperm.xlu0 %862, %v853
    %v864 = vpop.permute.xlu0 %863
    %867 = vset.pattern.permute.xlu0 0
    %868 = vperm.xlu0 %867, %v854
    %v869 = vpop.permute.xlu0 %868
    %872 = vset.pattern.permute.xlu0 0
    %873 = vperm.xlu0 %872, %v855
    %v874 = vpop.permute.xlu0 %873
    %877 = vset.pattern.permute.xlu0 0
    %878 = vperm.xlu0 %877, %v856
    %v879 = vpop.permute.xlu0 %878
    %v881 = vlaneseq
    %v882 = vshrl.u32 %v881, 7
    %v883 = vsub.s32 0, %v882
    %v884 = vrot.slane %v851, %v883
    %v885 = vmul.f32 %v864, %v884
    %v886 = vmul.f32 %v869, %v884
    %v887 = vmul.f32 %v874, %v884
    %v888 = vmul.f32 %v879, %v884
    %v889 = vadd.f32 %v857, %v885
    %v890 = vadd.f32 %v858, %v886
    %v891 = vadd.f32 %v859, %v887
    %v892 = vadd.f32 %v860, %v888
    %893 = vst [vmem:[#allocation2] sm:$0xff] %v889
    %894 = vst [vmem:[#allocation2 + $0x8] sm:$0xff] %v890
    %895 = vst [vmem:[#allocation2 + $0x10] sm:$0xff] %v891
    %896 = vst [vmem:[#allocation2 + $0x18] sm:$0xff] %v892
    %v897 = vld [vmem:[#allocation2 + $0xd] sm:$0x1]
    %vm898 = vcmp.ge.f32.partialorder %v897, 0.25
    %v899 = vsel %vm898, 1, 0
    %v900 = vcvt.s32.f32 %v899
    %901 = vst [vmem:[#allocation8 + $0xd] sm:$0x1] %v900
    %v902 = vld [vmem:[%s3 + $0x13] sm:$0xff]
    %v903 = vld [vmem:[%s3 + $0x1b] sm:$0xff]
    %v904 = vld [vmem:[%s3 + $0x23] sm:$0xff]
    %v905 = vld [vmem:[%s3 + $0x2b] sm:$0xff]
    %v906 = vld [vmem:[#allocation2] sm:$0xff]
    %v907 = vld [vmem:[#allocation2 + $0x8] sm:$0xff]
    %v908 = vld [vmem:[#allocation2 + $0x10] sm:$0xff]
    %v909 = vld [vmem:[#allocation2 + $0x18] sm:$0xff]
    %911 = vset.pattern.permute.xlu0 0
    %912 = vperm.xlu0 %911, %v902
    %v913 = vpop.permute.xlu0 %912
    %916 = vset.pattern.permute.xlu0 0
    %917 = vperm.xlu0 %916, %v903
    %v918 = vpop.permute.xlu0 %917
    %921 = vset.pattern.permute.xlu0 0
    %922 = vperm.xlu0 %921, %v904
    %v923 = vpop.permute.xlu0 %922
    %926 = vset.pattern.permute.xlu0 0
    %927 = vperm.xlu0 %926, %v905
    %v928 = vpop.permute.xlu0 %927
    %v930 = vlaneseq
    %v931 = vshrl.u32 %v930, 7
    %v932 = vsub.s32 0, %v931
    %v933 = vrot.slane %v900, %v932
    %v934 = vmul.f32 %v913, %v933
    %v935 = vmul.f32 %v918, %v933
    %v936 = vmul.f32 %v923, %v933
    %v937 = vmul.f32 %v928, %v933
    %v938 = vadd.f32 %v906, %v934
    %v939 = vadd.f32 %v907, %v935
    %v940 = vadd.f32 %v908, %v936
    %v941 = vadd.f32 %v909, %v937
    %942 = vst [vmem:[#allocation2] sm:$0xff] %v938
    %943 = vst [vmem:[#allocation2 + $0x8] sm:$0xff] %v939
    %944 = vst [vmem:[#allocation2 + $0x10] sm:$0xff] %v940
    %945 = vst [vmem:[#allocation2 + $0x18] sm:$0xff] %v941
    %v946 = vld [vmem:[#allocation2 + $0xe] sm:$0x1]
    %vm947 = vcmp.ge.f32.partialorder %v946, 0.25
    %v948 = vsel %vm947, 1, 0
    %v949 = vcvt.s32.f32 %v948
    %950 = vst [vmem:[#allocation8 + $0xe] sm:$0x1] %v949
    %v951 = vld [vmem:[%s3 + $0x12] sm:$0xff]
    %v952 = vld [vmem:[%s3 + $0x1a] sm:$0xff]
    %v953 = vld [vmem:[%s3 + $0x22] sm:$0xff]
    %v954 = vld [vmem:[%s3 + $0x2a] sm:$0xff]
    %v955 = vld [vmem:[#allocation2] sm:$0xff]
    %v956 = vld [vmem:[#allocation2 + $0x8] sm:$0xff]
    %v957 = vld [vmem:[#allocation2 + $0x10] sm:$0xff]
    %v958 = vld [vmem:[#allocation2 + $0x18] sm:$0xff]
    %960 = vset.pattern.permute.xlu0 0
    %961 = vperm.xlu0 %960, %v951
    %v962 = vpop.permute.xlu0 %961
    %965 = vset.pattern.permute.xlu0 0
    %966 = vperm.xlu0 %965, %v952
    %v967 = vpop.permute.xlu0 %966
    %970 = vset.pattern.permute.xlu0 0
    %971 = vperm.xlu0 %970, %v953
    %v972 = vpop.permute.xlu0 %971
    %975 = vset.pattern.permute.xlu0 0
    %976 = vperm.xlu0 %975, %v954
    %v977 = vpop.permute.xlu0 %976
    %v979 = vlaneseq
    %v980 = vshrl.u32 %v979, 7
    %v981 = vsub.s32 0, %v980
    %v982 = vrot.slane %v949, %v981
    %v983 = vmul.f32 %v962, %v982
    %v984 = vmul.f32 %v967, %v982
    %v985 = vmul.f32 %v972, %v982
    %v986 = vmul.f32 %v977, %v982
    %v987 = vadd.f32 %v955, %v983
    %v988 = vadd.f32 %v956, %v984
    %v989 = vadd.f32 %v957, %v985
    %v990 = vadd.f32 %v958, %v986
    %991 = vst [vmem:[#allocation2] sm:$0xff] %v987
    %992 = vst [vmem:[#allocation2 + $0x8] sm:$0xff] %v988
    %993 = vst [vmem:[#allocation2 + $0x10] sm:$0xff] %v989
    %994 = vst [vmem:[#allocation2 + $0x18] sm:$0xff] %v990
    %v995 = vld [vmem:[#allocation2 + $0xf] sm:$0x1]
    %vm996 = vcmp.ge.f32.partialorder %v995, 0.25
    %v997 = vsel %vm996, 1, 0
    %v998 = vcvt.s32.f32 %v997
    %999 = vst [vmem:[#allocation8 + $0xf] sm:$0x1] %v998
    %v1000 = vld [vmem:[%s3 + $0x11] sm:$0xff]
    %v1001 = vld [vmem:[%s3 + $0x19] sm:$0xff]
    %v1002 = vld [vmem:[%s3 + $0x21] sm:$0xff]
    %v1003 = vld [vmem:[%s3 + $0x29] sm:$0xff]
    %v1004 = vld [vmem:[#allocation2] sm:$0xff]
    %v1005 = vld [vmem:[#allocation2 + $0x8] sm:$0xff]
    %v1006 = vld [vmem:[#allocation2 + $0x10] sm:$0xff]
    %v1007 = vld [vmem:[#allocation2 + $0x18] sm:$0xff]
    %1009 = vset.pattern.permute.xlu0 0
    %1010 = vperm.xlu0 %1009, %v1000
    %v1011 = vpop.permute.xlu0 %1010
    %1014 = vset.pattern.permute.xlu0 0
    %1015 = vperm.xlu0 %1014, %v1001
    %v1016 = vpop.permute.xlu0 %1015
    %1019 = vset.pattern.permute.xlu0 0
    %1020 = vperm.xlu0 %1019, %v1002
    %v1021 = vpop.permute.xlu0 %1020
    %1024 = vset.pattern.permute.xlu0 0
    %1025 = vperm.xlu0 %1024, %v1003
    %v1026 = vpop.permute.xlu0 %1025
    %v1028 = vlaneseq
    %v1029 = vshrl.u32 %v1028, 7
    %v1030 = vsub.s32 0, %v1029
    %v1031 = vrot.slane %v998, %v1030
    %v1032 = vmul.f32 %v1011, %v1031
    %v1033 = vmul.f32 %v1016, %v1031
    %v1034 = vmul.f32 %v1021, %v1031
    %v1035 = vmul.f32 %v1026, %v1031
    %v1036 = vadd.f32 %v1004, %v1032
    %v1037 = vadd.f32 %v1005, %v1033
    %v1038 = vadd.f32 %v1006, %v1034
    %v1039 = vadd.f32 %v1007, %v1035
    %1040 = vst [vmem:[#allocation2] sm:$0xff] %v1036
    %1041 = vst [vmem:[#allocation2 + $0x8] sm:$0xff] %v1037
    %1042 = vst [vmem:[#allocation2 + $0x10] sm:$0xff] %v1038
    %1043 = vst [vmem:[#allocation2 + $0x18] sm:$0xff] %v1039
    %v1044 = vld [vmem:[#allocation2 + $0x10] sm:$0x1]
    %vm1045 = vcmp.ge.f32.partialorder %v1044, 0.25
    %v1046 = vsel %vm1045, 1, 0
    %v1047 = vcvt.s32.f32 %v1046
    %1048 = vst [vmem:[#allocation8 + $0x10] sm:$0x1] %v1047
    %v1049 = vld [vmem:[%s3 + $0x10] sm:$0xff]
    %v1050 = vld [vmem:[%s3 + $0x18] sm:$0xff]
    %v1051 = vld [vmem:[%s3 + $0x20] sm:$0xff]
    %v1052 = vld [vmem:[%s3 + $0x28] sm:$0xff]
    %v1053 = vld [vmem:[#allocation2] sm:$0xff]
    %v1054 = vld [vmem:[#allocation2 + $0x8] sm:$0xff]
    %v1055 = vld [vmem:[#allocation2 + $0x10] sm:$0xff]
    %v1056 = vld [vmem:[#allocation2 + $0x18] sm:$0xff]
    %1058 = vset.pattern.permute.xlu0 0
    %1059 = vperm.xlu0 %1058, %v1049
    %v1060 = vpop.permute.xlu0 %1059
    %1063 = vset.pattern.permute.xlu0 0
    %1064 = vperm.xlu0 %1063, %v1050
    %v1065 = vpop.permute.xlu0 %1064
    %1068 = vset.pattern.permute.xlu0 0
    %1069 = vperm.xlu0 %1068, %v1051
    %v1070 = vpop.permute.xlu0 %1069
    %1073 = vset.pattern.permute.xlu0 0
    %1074 = vperm.xlu0 %1073, %v1052
    %v1075 = vpop.permute.xlu0 %1074
    %v1077 = vlaneseq
    %v1078 = vshrl.u32 %v1077, 7
    %v1079 = vsub.s32 0, %v1078
    %v1080 = vrot.slane %v1047, %v1079
    %v1081 = vmul.f32 %v1060, %v1080
    %v1082 = vmul.f32 %v1065, %v1080
    %v1083 = vmul.f32 %v1070, %v1080
    %v1084 = vmul.f32 %v1075, %v1080
    %v1085 = vadd.f32 %v1053, %v1081
    %v1086 = vadd.f32 %v1054, %v1082
    %v1087 = vadd.f32 %v1055, %v1083
    %v1088 = vadd.f32 %v1056, %v1084
    %1089 = vst [vmem:[#allocation2] sm:$0xff] %v1085
    %1090 = vst [vmem:[#allocation2 + $0x8] sm:$0xff] %v1086
    %1091 = vst [vmem:[#allocation2 + $0x10] sm:$0xff] %v1087
    %1092 = vst [vmem:[#allocation2 + $0x18] sm:$0xff] %v1088
    %v1093 = vld [vmem:[#allocation2 + $0x11] sm:$0x1]
    %vm1094 = vcmp.ge.f32.partialorder %v1093, 0.25
    %v1095 = vsel %vm1094, 1, 0
    %v1096 = vcvt.s32.f32 %v1095
    %1097 = vst [vmem:[#allocation8 + $0x11] sm:$0x1] %v1096
    %v1098 = vld [vmem:[%s3 + $0xf] sm:$0xff]
    %v1099 = vld [vmem:[%s3 + $0x17] sm:$0xff]
    %v1100 = vld [vmem:[%s3 + $0x1f] sm:$0xff]
    %v1101 = vld [vmem:[%s3 + $0x27] sm:$0xff]
    %v1102 = vld [vmem:[#allocation2] sm:$0xff]
    %v1103 = vld [vmem:[#allocation2 + $0x8] sm:$0xff]
    %v1104 = vld [vmem:[#allocation2 + $0x10] sm:$0xff]
    %v1105 = vld [vmem:[#allocation2 + $0x18] sm:$0xff]
    %1107 = vset.pattern.permute.xlu0 0
    %1108 = vperm.xlu0 %1107, %v1098
    %v1109 = vpop.permute.xlu0 %1108
    %1112 = vset.pattern.permute.xlu0 0
    %1113 = vperm.xlu0 %1112, %v1099
    %v1114 = vpop.permute.xlu0 %1113
    %1117 = vset.pattern.permute.xlu0 0
    %1118 = vperm.xlu0 %1117, %v1100
    %v1119 = vpop.permute.xlu0 %1118
    %1122 = vset.pattern.permute.xlu0 0
    %1123 = vperm.xlu0 %1122, %v1101
    %v1124 = vpop.permute.xlu0 %1123
    %v1126 = vlaneseq
    %v1127 = vshrl.u32 %v1126, 7
    %v1128 = vsub.s32 0, %v1127
    %v1129 = vrot.slane %v1096, %v1128
    %v1130 = vmul.f32 %v1109, %v1129
    %v1131 = vmul.f32 %v1114, %v1129
    %v1132 = vmul.f32 %v1119, %v1129
    %v1133 = vmul.f32 %v1124, %v1129
    %v1134 = vadd.f32 %v1102, %v1130
    %v1135 = vadd.f32 %v1103, %v1131
    %v1136 = vadd.f32 %v1104, %v1132
    %v1137 = vadd.f32 %v1105, %v1133
    %1138 = vst [vmem:[#allocation2] sm:$0xff] %v1134
    %1139 = vst [vmem:[#allocation2 + $0x8] sm:$0xff] %v1135
    %1140 = vst [vmem:[#allocation2 + $0x10] sm:$0xff] %v1136
    %1141 = vst [vmem:[#allocation2 + $0x18] sm:$0xff] %v1137
    %v1142 = vld [vmem:[#allocation2 + $0x12] sm:$0x1]
    %vm1143 = vcmp.ge.f32.partialorder %v1142, 0.25
    %v1144 = vsel %vm1143, 1, 0
    %v1145 = vcvt.s32.f32 %v1144
    %1146 = vst [vmem:[#allocation8 + $0x12] sm:$0x1] %v1145
    %v1147 = vld [vmem:[%s3 + $0xe] sm:$0xff]
    %v1148 = vld [vmem:[%s3 + $0x16] sm:$0xff]
    %v1149 = vld [vmem:[%s3 + $0x1e] sm:$0xff]
    %v1150 = vld [vmem:[%s3 + $0x26] sm:$0xff]
    %v1151 = vld [vmem:[#allocation2] sm:$0xff]
    %v1152 = vld [vmem:[#allocation2 + $0x8] sm:$0xff]
    %v1153 = vld [vmem:[#allocation2 + $0x10] sm:$0xff]
    %v1154 = vld [vmem:[#allocation2 + $0x18] sm:$0xff]
    %1156 = vset.pattern.permute.xlu0 0
    %1157 = vperm.xlu0 %1156, %v1147
    %v1158 = vpop.permute.xlu0 %1157
    %1161 = vset.pattern.permute.xlu0 0
    %1162 = vperm.xlu0 %1161, %v1148
    %v1163 = vpop.permute.xlu0 %1162
    %1166 = vset.pattern.permute.xlu0 0
    %1167 = vperm.xlu0 %1166, %v1149
    %v1168 = vpop.permute.xlu0 %1167
    %1171 = vset.pattern.permute.xlu0 0
    %1172 = vperm.xlu0 %1171, %v1150
    %v1173 = vpop.permute.xlu0 %1172
    %v1175 = vlaneseq
    %v1176 = vshrl.u32 %v1175, 7
    %v1177 = vsub.s32 0, %v1176
    %v1178 = vrot.slane %v1145, %v1177
    %v1179 = vmul.f32 %v1158, %v1178
    %v1180 = vmul.f32 %v1163, %v1178
    %v1181 = vmul.f32 %v1168, %v1178
    %v1182 = vmul.f32 %v1173, %v1178
    %v1183 = vadd.f32 %v1151, %v1179
    %v1184 = vadd.f32 %v1152, %v1180
    %v1185 = vadd.f32 %v1153, %v1181
    %v1186 = vadd.f32 %v1154, %v1182
    %1187 = vst [vmem:[#allocation2] sm:$0xff] %v1183
    %1188 = vst [vmem:[#allocation2 + $0x8] sm:$0xff] %v1184
    %1189 = vst [vmem:[#allocation2 + $0x10] sm:$0xff] %v1185
    %1190 = vst [vmem:[#allocation2 + $0x18] sm:$0xff] %v1186
    %v1191 = vld [vmem:[#allocation2 + $0x13] sm:$0x1]
    %vm1192 = vcmp.ge.f32.partialorder %v1191, 0.25
    %v1193 = vsel %vm1192, 1, 0
    %v1194 = vcvt.s32.f32 %v1193
    %1195 = vst [vmem:[#allocation8 + $0x13] sm:$0x1] %v1194
    %v1196 = vld [vmem:[%s3 + $0xd] sm:$0xff]
    %v1197 = vld [vmem:[%s3 + $0x15] sm:$0xff]
    %v1198 = vld [vmem:[%s3 + $0x1d] sm:$0xff]
    %v1199 = vld [vmem:[%s3 + $0x25] sm:$0xff]
    %v1200 = vld [vmem:[#allocation2] sm:$0xff]
    %v1201 = vld [vmem:[#allocation2 + $0x8] sm:$0xff]
    %v1202 = vld [vmem:[#allocation2 + $0x10] sm:$0xff]
    %v1203 = vld [vmem:[#allocation2 + $0x18] sm:$0xff]
    %1205 = vset.pattern.permute.xlu0 0
    %1206 = vperm.xlu0 %1205, %v1196
    %v1207 = vpop.permute.xlu0 %1206
    %1210 = vset.pattern.permute.xlu0 0
    %1211 = vperm.xlu0 %1210, %v1197
    %v1212 = vpop.permute.xlu0 %1211
    %1215 = vset.pattern.permute.xlu0 0
    %1216 = vperm.xlu0 %1215, %v1198
    %v1217 = vpop.permute.xlu0 %1216
    %1220 = vset.pattern.permute.xlu0 0
    %1221 = vperm.xlu0 %1220, %v1199
    %v1222 = vpop.permute.xlu0 %1221
    %v1224 = vlaneseq
    %v1225 = vshrl.u32 %v1224, 7
    %v1226 = vsub.s32 0, %v1225
    %v1227 = vrot.slane %v1194, %v1226
    %v1228 = vmul.f32 %v1207, %v1227
    %v1229 = vmul.f32 %v1212, %v1227
    %v1230 = vmul.f32 %v1217, %v1227
    %v1231 = vmul.f32 %v1222, %v1227
    %v1232 = vadd.f32 %v1200, %v1228
    %v1233 = vadd.f32 %v1201, %v1229
    %v1234 = vadd.f32 %v1202, %v1230
    %v1235 = vadd.f32 %v1203, %v1231
    %1236 = vst [vmem:[#allocation2] sm:$0xff] %v1232
    %1237 = vst [vmem:[#allocation2 + $0x8] sm:$0xff] %v1233
    %1238 = vst [vmem:[#allocation2 + $0x10] sm:$0xff] %v1234
    %1239 = vst [vmem:[#allocation2 + $0x18] sm:$0xff] %v1235
    %v1240 = vld [vmem:[#allocation2 + $0x14] sm:$0x1]
    %vm1241 = vcmp.ge.f32.partialorder %v1240, 0.25
    %v1242 = vsel %vm1241, 1, 0
    %v1243 = vcvt.s32.f32 %v1242
    %1244 = vst [vmem:[#allocation8 + $0x14] sm:$0x1] %v1243
    %v1245 = vld [vmem:[%s3 + $0xc] sm:$0xff]
    %v1246 = vld [vmem:[%s3 + $0x14] sm:$0xff]
    %v1247 = vld [vmem:[%s3 + $0x1c] sm:$0xff]
    %v1248 = vld [vmem:[%s3 + $0x24] sm:$0xff]
    %v1249 = vld [vmem:[#allocation2] sm:$0xff]
    %v1250 = vld [vmem:[#allocation2 + $0x8] sm:$0xff]
    %v1251 = vld [vmem:[#allocation2 + $0x10] sm:$0xff]
    %v1252 = vld [vmem:[#allocation2 + $0x18] sm:$0xff]
    %1254 = vset.pattern.permute.xlu0 0
    %1255 = vperm.xlu0 %1254, %v1245
    %v1256 = vpop.permute.xlu0 %1255
    %1259 = vset.pattern.permute.xlu0 0
    %1260 = vperm.xlu0 %1259, %v1246
    %v1261 = vpop.permute.xlu0 %1260
    %1264 = vset.pattern.permute.xlu0 0
    %1265 = vperm.xlu0 %1264, %v1247
    %v1266 = vpop.permute.xlu0 %1265
    %1269 = vset.pattern.permute.xlu0 0
    %1270 = vperm.xlu0 %1269, %v1248
    %v1271 = vpop.permute.xlu0 %1270
    %v1273 = vlaneseq
    %v1274 = vshrl.u32 %v1273, 7
    %v1275 = vsub.s32 0, %v1274
    %v1276 = vrot.slane %v1243, %v1275
    %v1277 = vmul.f32 %v1256, %v1276
    %v1278 = vmul.f32 %v1261, %v1276
    %v1279 = vmul.f32 %v1266, %v1276
    %v1280 = vmul.f32 %v1271, %v1276
    %v1281 = vadd.f32 %v1249, %v1277
    %v1282 = vadd.f32 %v1250, %v1278
    %v1283 = vadd.f32 %v1251, %v1279
    %v1284 = vadd.f32 %v1252, %v1280
    %1285 = vst [vmem:[#allocation2] sm:$0xff] %v1281
    %1286 = vst [vmem:[#allocation2 + $0x8] sm:$0xff] %v1282
    %1287 = vst [vmem:[#allocation2 + $0x10] sm:$0xff] %v1283
    %1288 = vst [vmem:[#allocation2 + $0x18] sm:$0xff] %v1284
    %v1289 = vld [vmem:[#allocation2 + $0x15] sm:$0x1]
    %vm1290 = vcmp.ge.f32.partialorder %v1289, 0.25
    %v1291 = vsel %vm1290, 1, 0
    %v1292 = vcvt.s32.f32 %v1291
    %1293 = vst [vmem:[#allocation8 + $0x15] sm:$0x1] %v1292
    %v1294 = vld [vmem:[%s3 + $0xb] sm:$0xff]
    %v1295 = vld [vmem:[%s3 + $0x13] sm:$0xff]
    %v1296 = vld [vmem:[%s3 + $0x1b] sm:$0xff]
    %v1297 = vld [vmem:[%s3 + $0x23] sm:$0xff]
    %v1298 = vld [vmem:[#allocation2] sm:$0xff]
    %v1299 = vld [vmem:[#allocation2 + $0x8] sm:$0xff]
    %v1300 = vld [vmem:[#allocation2 + $0x10] sm:$0xff]
    %v1301 = vld [vmem:[#allocation2 + $0x18] sm:$0xff]
    %1303 = vset.pattern.permute.xlu0 0
    %1304 = vperm.xlu0 %1303, %v1294
    %v1305 = vpop.permute.xlu0 %1304
    %1308 = vset.pattern.permute.xlu0 0
    %1309 = vperm.xlu0 %1308, %v1295
    %v1310 = vpop.permute.xlu0 %1309
    %1313 = vset.pattern.permute.xlu0 0
    %1314 = vperm.xlu0 %1313, %v1296
    %v1315 = vpop.permute.xlu0 %1314
    %1318 = vset.pattern.permute.xlu0 0
    %1319 = vperm.xlu0 %1318, %v1297
    %v1320 = vpop.permute.xlu0 %1319
    %v1322 = vlaneseq
    %v1323 = vshrl.u32 %v1322, 7
    %v1324 = vsub.s32 0, %v1323
    %v1325 = vrot.slane %v1292, %v1324
    %v1326 = vmul.f32 %v1305, %v1325
    %v1327 = vmul.f32 %v1310, %v1325
    %v1328 = vmul.f32 %v1315, %v1325
    %v1329 = vmul.f32 %v1320, %v1325
    %v1330 = vadd.f32 %v1298, %v1326
    %v1331 = vadd.f32 %v1299, %v1327
    %v1332 = vadd.f32 %v1300, %v1328
    %v1333 = vadd.f32 %v1301, %v1329
    %1334 = vst [vmem:[#allocation2] sm:$0xff] %v1330
    %1335 = vst [vmem:[#allocation2 + $0x8] sm:$0xff] %v1331
    %1336 = vst [vmem:[#allocation2 + $0x10] sm:$0xff] %v1332
    %1337 = vst [vmem:[#allocation2 + $0x18] sm:$0xff] %v1333
    %v1338 = vld [vmem:[#allocation2 + $0x16] sm:$0x1]
    %vm1339 = vcmp.ge.f32.partialorder %v1338, 0.25
    %v1340 = vsel %vm1339, 1, 0
    %v1341 = vcvt.s32.f32 %v1340
    %1342 = vst [vmem:[#allocation8 + $0x16] sm:$0x1] %v1341
    %v1343 = vld [vmem:[%s3 + $0xa] sm:$0xff]
    %v1344 = vld [vmem:[%s3 + $0x12] sm:$0xff]
    %v1345 = vld [vmem:[%s3 + $0x1a] sm:$0xff]
    %v1346 = vld [vmem:[%s3 + $0x22] sm:$0xff]
    %v1347 = vld [vmem:[#allocation2] sm:$0xff]
    %v1348 = vld [vmem:[#allocation2 + $0x8] sm:$0xff]
    %v1349 = vld [vmem:[#allocation2 + $0x10] sm:$0xff]
    %v1350 = vld [vmem:[#allocation2 + $0x18] sm:$0xff]
    %1352 = vset.pattern.permute.xlu0 0
    %1353 = vperm.xlu0 %1352, %v1343
    %v1354 = vpop.permute.xlu0 %1353
    %1357 = vset.pattern.permute.xlu0 0
    %1358 = vperm.xlu0 %1357, %v1344
    %v1359 = vpop.permute.xlu0 %1358
    %1362 = vset.pattern.permute.xlu0 0
    %1363 = vperm.xlu0 %1362, %v1345
    %v1364 = vpop.permute.xlu0 %1363
    %1367 = vset.pattern.permute.xlu0 0
    %1368 = vperm.xlu0 %1367, %v1346
    %v1369 = vpop.permute.xlu0 %1368
    %v1371 = vlaneseq
    %v1372 = vshrl.u32 %v1371, 7
    %v1373 = vsub.s32 0, %v1372
    %v1374 = vrot.slane %v1341, %v1373
    %v1375 = vmul.f32 %v1354, %v1374
    %v1376 = vmul.f32 %v1359, %v1374
    %v1377 = vmul.f32 %v1364, %v1374
    %v1378 = vmul.f32 %v1369, %v1374
    %v1379 = vadd.f32 %v1347, %v1375
    %v1380 = vadd.f32 %v1348, %v1376
    %v1381 = vadd.f32 %v1349, %v1377
    %v1382 = vadd.f32 %v1350, %v1378
    %1383 = vst [vmem:[#allocation2] sm:$0xff] %v1379
    %1384 = vst [vmem:[#allocation2 + $0x8] sm:$0xff] %v1380
    %1385 = vst [vmem:[#allocation2 + $0x10] sm:$0xff] %v1381
    %1386 = vst [vmem:[#allocation2 + $0x18] sm:$0xff] %v1382
    %v1387 = vld [vmem:[#allocation2 + $0x17] sm:$0x1]
    %vm1388 = vcmp.ge.f32.partialorder %v1387, 0.25
    %v1389 = vsel %vm1388, 1, 0
    %v1390 = vcvt.s32.f32 %v1389
    %1391 = vst [vmem:[#allocation8 + $0x17] sm:$0x1] %v1390
    %v1392 = vld [vmem:[%s3 + $0x9] sm:$0xff]
    %v1393 = vld [vmem:[%s3 + $0x11] sm:$0xff]
    %v1394 = vld [vmem:[%s3 + $0x19] sm:$0xff]
    %v1395 = vld [vmem:[%s3 + $0x21] sm:$0xff]
    %v1396 = vld [vmem:[#allocation2] sm:$0xff]
    %v1397 = vld [vmem:[#allocation2 + $0x8] sm:$0xff]
    %v1398 = vld [vmem:[#allocation2 + $0x10] sm:$0xff]
    %v1399 = vld [vmem:[#allocation2 + $0x18] sm:$0xff]
    %1401 = vset.pattern.permute.xlu0 0
    %1402 = vperm.xlu0 %1401, %v1392
    %v1403 = vpop.permute.xlu0 %1402
    %1406 = vset.pattern.permute.xlu0 0
    %1407 = vperm.xlu0 %1406, %v1393
    %v1408 = vpop.permute.xlu0 %1407
    %1411 = vset.pattern.permute.xlu0 0
    %1412 = vperm.xlu0 %1411, %v1394
    %v1413 = vpop.permute.xlu0 %1412
    %1416 = vset.pattern.permute.xlu0 0
    %1417 = vperm.xlu0 %1416, %v1395
    %v1418 = vpop.permute.xlu0 %1417
    %v1420 = vlaneseq
    %v1421 = vshrl.u32 %v1420, 7
    %v1422 = vsub.s32 0, %v1421
    %v1423 = vrot.slane %v1390, %v1422
    %v1424 = vmul.f32 %v1403, %v1423
    %v1425 = vmul.f32 %v1408, %v1423
    %v1426 = vmul.f32 %v1413, %v1423
    %v1427 = vmul.f32 %v1418, %v1423
    %v1428 = vadd.f32 %v1396, %v1424
    %v1429 = vadd.f32 %v1397, %v1425
    %v1430 = vadd.f32 %v1398, %v1426
    %v1431 = vadd.f32 %v1399, %v1427
    %1432 = vst [vmem:[#allocation2] sm:$0xff] %v1428
    %1433 = vst [vmem:[#allocation2 + $0x8] sm:$0xff] %v1429
    %1434 = vst [vmem:[#allocation2 + $0x10] sm:$0xff] %v1430
    %1435 = vst [vmem:[#allocation2 + $0x18] sm:$0xff] %v1431
    %v1436 = vld [vmem:[#allocation2 + $0x18] sm:$0x1]
    %vm1437 = vcmp.ge.f32.partialorder %v1436, 0.25
    %v1438 = vsel %vm1437, 1, 0
    %v1439 = vcvt.s32.f32 %v1438
    %1440 = vst [vmem:[#allocation8 + $0x18] sm:$0x1] %v1439
    %v1441 = vld [vmem:[%s3 + $0x8] sm:$0xff]
    %v1442 = vld [vmem:[%s3 + $0x10] sm:$0xff]
    %v1443 = vld [vmem:[%s3 + $0x18] sm:$0xff]
    %v1444 = vld [vmem:[%s3 + $0x20] sm:$0xff]
    %v1445 = vld [vmem:[#allocation2] sm:$0xff]
    %v1446 = vld [vmem:[#allocation2 + $0x8] sm:$0xff]
    %v1447 = vld [vmem:[#allocation2 + $0x10] sm:$0xff]
    %v1448 = vld [vmem:[#allocation2 + $0x18] sm:$0xff]
    %1450 = vset.pattern.permute.xlu0 0
    %1451 = vperm.xlu0 %1450, %v1441
    %v1452 = vpop.permute.xlu0 %1451
    %1455 = vset.pattern.permute.xlu0 0
    %1456 = vperm.xlu0 %1455, %v1442
    %v1457 = vpop.permute.xlu0 %1456
    %1460 = vset.pattern.permute.xlu0 0
    %1461 = vperm.xlu0 %1460, %v1443
    %v1462 = vpop.permute.xlu0 %1461
    %1465 = vset.pattern.permute.xlu0 0
    %1466 = vperm.xlu0 %1465, %v1444
    %v1467 = vpop.permute.xlu0 %1466
    %v1469 = vlaneseq
    %v1470 = vshrl.u32 %v1469, 7
    %v1471 = vsub.s32 0, %v1470
    %v1472 = vrot.slane %v1439, %v1471
    %v1473 = vmul.f32 %v1452, %v1472
    %v1474 = vmul.f32 %v1457, %v1472
    %v1475 = vmul.f32 %v1462, %v1472
    %v1476 = vmul.f32 %v1467, %v1472
    %v1477 = vadd.f32 %v1445, %v1473
    %v1478 = vadd.f32 %v1446, %v1474
    %v1479 = vadd.f32 %v1447, %v1475
    %v1480 = vadd.f32 %v1448, %v1476
    %1481 = vst [vmem:[#allocation2] sm:$0xff] %v1477
    %1482 = vst [vmem:[#allocation2 + $0x8] sm:$0xff] %v1478
    %1483 = vst [vmem:[#allocation2 + $0x10] sm:$0xff] %v1479
    %1484 = vst [vmem:[#allocation2 + $0x18] sm:$0xff] %v1480
    %v1485 = vld [vmem:[#allocation2 + $0x19] sm:$0x1]
    %vm1486 = vcmp.ge.f32.partialorder %v1485, 0.25
    %v1487 = vsel %vm1486, 1, 0
    %v1488 = vcvt.s32.f32 %v1487
    %1489 = vst [vmem:[#allocation8 + $0x19] sm:$0x1] %v1488
    %v1490 = vld [vmem:[%s3 + $0x7] sm:$0xff]
    %v1491 = vld [vmem:[%s3 + $0xf] sm:$0xff]
    %v1492 = vld [vmem:[%s3 + $0x17] sm:$0xff]
    %v1493 = vld [vmem:[%s3 + $0x1f] sm:$0xff]
    %v1494 = vld [vmem:[#allocation2] sm:$0xff]
    %v1495 = vld [vmem:[#allocation2 + $0x8] sm:$0xff]
    %v1496 = vld [vmem:[#allocation2 + $0x10] sm:$0xff]
    %v1497 = vld [vmem:[#allocation2 + $0x18] sm:$0xff]
    %1499 = vset.pattern.permute.xlu0 0
    %1500 = vperm.xlu0 %1499, %v1490
    %v1501 = vpop.permute.xlu0 %1500
    %1504 = vset.pattern.permute.xlu0 0
    %1505 = vperm.xlu0 %1504, %v1491
    %v1506 = vpop.permute.xlu0 %1505
    %1509 = vset.pattern.permute.xlu0 0
    %1510 = vperm.xlu0 %1509, %v1492
    %v1511 = vpop.permute.xlu0 %1510
    %1514 = vset.pattern.permute.xlu0 0
    %1515 = vperm.xlu0 %1514, %v1493
    %v1516 = vpop.permute.xlu0 %1515
    %v1518 = vlaneseq
    %v1519 = vshrl.u32 %v1518, 7
    %v1520 = vsub.s32 0, %v1519
    %v1521 = vrot.slane %v1488, %v1520
    %v1522 = vmul.f32 %v1501, %v1521
    %v1523 = vmul.f32 %v1506, %v1521
    %v1524 = vmul.f32 %v1511, %v1521
    %v1525 = vmul.f32 %v1516, %v1521
    %v1526 = vadd.f32 %v1494, %v1522
    %v1527 = vadd.f32 %v1495, %v1523
    %v1528 = vadd.f32 %v1496, %v1524
    %v1529 = vadd.f32 %v1497, %v1525
    %1530 = vst [vmem:[#allocation2] sm:$0xff] %v1526
    %1531 = vst [vmem:[#allocation2 + $0x8] sm:$0xff] %v1527
    %1532 = vst [vmem:[#allocation2 + $0x10] sm:$0xff] %v1528
    %1533 = vst [vmem:[#allocation2 + $0x18] sm:$0xff] %v1529
    %v1534 = vld [vmem:[#allocation2 + $0x1a] sm:$0x1]
    %vm1535 = vcmp.ge.f32.partialorder %v1534, 0.25
    %v1536 = vsel %vm1535, 1, 0
    %v1537 = vcvt.s32.f32 %v1536
    %1538 = vst [vmem:[#allocation8 + $0x1a] sm:$0x1] %v1537
    %v1539 = vld [vmem:[%s3 + $0x6] sm:$0xff]
    %v1540 = vld [vmem:[%s3 + $0xe] sm:$0xff]
    %v1541 = vld [vmem:[%s3 + $0x16] sm:$0xff]
    %v1542 = vld [vmem:[%s3 + $0x1e] sm:$0xff]
    %v1543 = vld [vmem:[#allocation2] sm:$0xff]
    %v1544 = vld [vmem:[#allocation2 + $0x8] sm:$0xff]
    %v1545 = vld [vmem:[#allocation2 + $0x10] sm:$0xff]
    %v1546 = vld [vmem:[#allocation2 + $0x18] sm:$0xff]
    %1548 = vset.pattern.permute.xlu0 0
    %1549 = vperm.xlu0 %1548, %v1539
    %v1550 = vpop.permute.xlu0 %1549
    %1553 = vset.pattern.permute.xlu0 0
    %1554 = vperm.xlu0 %1553, %v1540
    %v1555 = vpop.permute.xlu0 %1554
    %1558 = vset.pattern.permute.xlu0 0
    %1559 = vperm.xlu0 %1558, %v1541
    %v1560 = vpop.permute.xlu0 %1559
    %1563 = vset.pattern.permute.xlu0 0
    %1564 = vperm.xlu0 %1563, %v1542
    %v1565 = vpop.permute.xlu0 %1564
    %v1567 = vlaneseq
    %v1568 = vshrl.u32 %v1567, 7
    %v1569 = vsub.s32 0, %v1568
    %v1570 = vrot.slane %v1537, %v1569
    %v1571 = vmul.f32 %v1550, %v1570
    %v1572 = vmul.f32 %v1555, %v1570
    %v1573 = vmul.f32 %v1560, %v1570
    %v1574 = vmul.f32 %v1565, %v1570
    %v1575 = vadd.f32 %v1543, %v1571
    %v1576 = vadd.f32 %v1544, %v1572
    %v1577 = vadd.f32 %v1545, %v1573
    %v1578 = vadd.f32 %v1546, %v1574
    %1579 = vst [vmem:[#allocation2] sm:$0xff] %v1575
    %1580 = vst [vmem:[#allocation2 + $0x8] sm:$0xff] %v1576
    %1581 = vst [vmem:[#allocation2 + $0x10] sm:$0xff] %v1577
    %1582 = vst [vmem:[#allocation2 + $0x18] sm:$0xff] %v1578
    %v1583 = vld [vmem:[#allocation2 + $0x1b] sm:$0x1]
    %vm1584 = vcmp.ge.f32.partialorder %v1583, 0.25
    %v1585 = vsel %vm1584, 1, 0
    %v1586 = vcvt.s32.f32 %v1585
    %1587 = vst [vmem:[#allocation8 + $0x1b] sm:$0x1] %v1586
    %v1588 = vld [vmem:[%s3 + $0x5] sm:$0xff]
    %v1589 = vld [vmem:[%s3 + $0xd] sm:$0xff]
    %v1590 = vld [vmem:[%s3 + $0x15] sm:$0xff]
    %v1591 = vld [vmem:[%s3 + $0x1d] sm:$0xff]
    %v1592 = vld [vmem:[#allocation2] sm:$0xff]
    %v1593 = vld [vmem:[#allocation2 + $0x8] sm:$0xff]
    %v1594 = vld [vmem:[#allocation2 + $0x10] sm:$0xff]
    %v1595 = vld [vmem:[#allocation2 + $0x18] sm:$0xff]
    %1597 = vset.pattern.permute.xlu0 0
    %1598 = vperm.xlu0 %1597, %v1588
    %v1599 = vpop.permute.xlu0 %1598
    %1602 = vset.pattern.permute.xlu0 0
    %1603 = vperm.xlu0 %1602, %v1589
    %v1604 = vpop.permute.xlu0 %1603
    %1607 = vset.pattern.permute.xlu0 0
    %1608 = vperm.xlu0 %1607, %v1590
    %v1609 = vpop.permute.xlu0 %1608
    %1612 = vset.pattern.permute.xlu0 0
    %1613 = vperm.xlu0 %1612, %v1591
    %v1614 = vpop.permute.xlu0 %1613
    %v1616 = vlaneseq
    %v1617 = vshrl.u32 %v1616, 7
    %v1618 = vsub.s32 0, %v1617
    %v1619 = vrot.slane %v1586, %v1618
    %v1620 = vmul.f32 %v1599, %v1619
    %v1621 = vmul.f32 %v1604, %v1619
    %v1622 = vmul.f32 %v1609, %v1619
    %v1623 = vmul.f32 %v1614, %v1619
    %v1624 = vadd.f32 %v1592, %v1620
    %v1625 = vadd.f32 %v1593, %v1621
    %v1626 = vadd.f32 %v1594, %v1622
    %v1627 = vadd.f32 %v1595, %v1623
    %1628 = vst [vmem:[#allocation2] sm:$0xff] %v1624
    %1629 = vst [vmem:[#allocation2 + $0x8] sm:$0xff] %v1625
    %1630 = vst [vmem:[#allocation2 + $0x10] sm:$0xff] %v1626
    %1631 = vst [vmem:[#allocation2 + $0x18] sm:$0xff] %v1627
    %v1632 = vld [vmem:[#allocation2 + $0x1c] sm:$0x1]
    %vm1633 = vcmp.ge.f32.partialorder %v1632, 0.25
    %v1634 = vsel %vm1633, 1, 0
    %v1635 = vcvt.s32.f32 %v1634
    %1636 = vst [vmem:[#allocation8 + $0x1c] sm:$0x1] %v1635
    %v1637 = vld [vmem:[%s3 + $0x4] sm:$0xff]
    %v1638 = vld [vmem:[%s3 + $0xc] sm:$0xff]
    %v1639 = vld [vmem:[%s3 + $0x14] sm:$0xff]
    %v1640 = vld [vmem:[%s3 + $0x1c] sm:$0xff]
    %v1641 = vld [vmem:[#allocation2] sm:$0xff]
    %v1642 = vld [vmem:[#allocation2 + $0x8] sm:$0xff]
    %v1643 = vld [vmem:[#allocation2 + $0x10] sm:$0xff]
    %v1644 = vld [vmem:[#allocation2 + $0x18] sm:$0xff]
    %1646 = vset.pattern.permute.xlu0 0
    %1647 = vperm.xlu0 %1646, %v1637
    %v1648 = vpop.permute.xlu0 %1647
    %1651 = vset.pattern.permute.xlu0 0
    %1652 = vperm.xlu0 %1651, %v1638
    %v1653 = vpop.permute.xlu0 %1652
    %1656 = vset.pattern.permute.xlu0 0
    %1657 = vperm.xlu0 %1656, %v1639
    %v1658 = vpop.permute.xlu0 %1657
    %1661 = vset.pattern.permute.xlu0 0
    %1662 = vperm.xlu0 %1661, %v1640
    %v1663 = vpop.permute.xlu0 %1662
    %v1665 = vlaneseq
    %v1666 = vshrl.u32 %v1665, 7
    %v1667 = vsub.s32 0, %v1666
    %v1668 = vrot.slane %v1635, %v1667
    %v1669 = vmul.f32 %v1648, %v1668
    %v1670 = vmul.f32 %v1653, %v1668
    %v1671 = vmul.f32 %v1658, %v1668
    %v1672 = vmul.f32 %v1663, %v1668
    %v1673 = vadd.f32 %v1641, %v1669
    %v1674 = vadd.f32 %v1642, %v1670
    %v1675 = vadd.f32 %v1643, %v1671
    %v1676 = vadd.f32 %v1644, %v1672
    %1677 = vst [vmem:[#allocation2] sm:$0xff] %v1673
    %1678 = vst [vmem:[#allocation2 + $0x8] sm:$0xff] %v1674
    %1679 = vst [vmem:[#allocation2 + $0x10] sm:$0xff] %v1675
    %1680 = vst [vmem:[#allocation2 + $0x18] sm:$0xff] %v1676
    %v1681 = vld [vmem:[#allocation2 + $0x1d] sm:$0x1]
    %vm1682 = vcmp.ge.f32.partialorder %v1681, 0.25
    %v1683 = vsel %vm1682, 1, 0
    %v1684 = vcvt.s32.f32 %v1683
    %1685 = vst [vmem:[#allocation8 + $0x1d] sm:$0x1] %v1684
    %v1686 = vld [vmem:[%s3 + $0x3] sm:$0xff]
    %v1687 = vld [vmem:[%s3 + $0xb] sm:$0xff]
    %v1688 = vld [vmem:[%s3 + $0x13] sm:$0xff]
    %v1689 = vld [vmem:[%s3 + $0x1b] sm:$0xff]
    %v1690 = vld [vmem:[#allocation2] sm:$0xff]
    %v1691 = vld [vmem:[#allocation2 + $0x8] sm:$0xff]
    %v1692 = vld [vmem:[#allocation2 + $0x10] sm:$0xff]
    %v1693 = vld [vmem:[#allocation2 + $0x18] sm:$0xff]
    %1695 = vset.pattern.permute.xlu0 0
    %1696 = vperm.xlu0 %1695, %v1686
    %v1697 = vpop.permute.xlu0 %1696
    %1700 = vset.pattern.permute.xlu0 0
    %1701 = vperm.xlu0 %1700, %v1687
    %v1702 = vpop.permute.xlu0 %1701
    %1705 = vset.pattern.permute.xlu0 0
    %1706 = vperm.xlu0 %1705, %v1688
    %v1707 = vpop.permute.xlu0 %1706
    %1710 = vset.pattern.permute.xlu0 0
    %1711 = vperm.xlu0 %1710, %v1689
    %v1712 = vpop.permute.xlu0 %1711
    %v1714 = vlaneseq
    %v1715 = vshrl.u32 %v1714, 7
    %v1716 = vsub.s32 0, %v1715
    %v1717 = vrot.slane %v1684, %v1716
    %v1718 = vmul.f32 %v1697, %v1717
    %v1719 = vmul.f32 %v1702, %v1717
    %v1720 = vmul.f32 %v1707, %v1717
    %v1721 = vmul.f32 %v1712, %v1717
    %v1722 = vadd.f32 %v1690, %v1718
    %v1723 = vadd.f32 %v1691, %v1719
    %v1724 = vadd.f32 %v1692, %v1720
    %v1725 = vadd.f32 %v1693, %v1721
    %1726 = vst [vmem:[#allocation2] sm:$0xff] %v1722
    %1727 = vst [vmem:[#allocation2 + $0x8] sm:$0xff] %v1723
    %1728 = vst [vmem:[#allocation2 + $0x10] sm:$0xff] %v1724
    %1729 = vst [vmem:[#allocation2 + $0x18] sm:$0xff] %v1725
    %v1730 = vld [vmem:[#allocation2 + $0x1e] sm:$0x1]
    %vm1731 = vcmp.ge.f32.partialorder %v1730, 0.25
    %v1732 = vsel %vm1731, 1, 0
    %v1733 = vcvt.s32.f32 %v1732
    %1734 = vst [vmem:[#allocation8 + $0x1e] sm:$0x1] %v1733
    %v1735 = vld [vmem:[%s3 + $0x2] sm:$0xff]
    %v1736 = vld [vmem:[%s3 + $0xa] sm:$0xff]
    %v1737 = vld [vmem:[%s3 + $0x12] sm:$0xff]
    %v1738 = vld [vmem:[%s3 + $0x1a] sm:$0xff]
    %v1739 = vld [vmem:[#allocation2] sm:$0xff]
    %v1740 = vld [vmem:[#allocation2 + $0x8] sm:$0xff]
    %v1741 = vld [vmem:[#allocation2 + $0x10] sm:$0xff]
    %v1742 = vld [vmem:[#allocation2 + $0x18] sm:$0xff]
    %1744 = vset.pattern.permute.xlu0 0
    %1745 = vperm.xlu0 %1744, %v1735
    %v1746 = vpop.permute.xlu0 %1745
    %1749 = vset.pattern.permute.xlu0 0
    %1750 = vperm.xlu0 %1749, %v1736
    %v1751 = vpop.permute.xlu0 %1750
    %1754 = vset.pattern.permute.xlu0 0
    %1755 = vperm.xlu0 %1754, %v1737
    %v1756 = vpop.permute.xlu0 %1755
    %1759 = vset.pattern.permute.xlu0 0
    %1760 = vperm.xlu0 %1759, %v1738
    %v1761 = vpop.permute.xlu0 %1760
    %v1763 = vlaneseq
    %v1764 = vshrl.u32 %v1763, 7
    %v1765 = vsub.s32 0, %v1764
    %v1766 = vrot.slane %v1733, %v1765
    %v1767 = vmul.f32 %v1746, %v1766
    %v1768 = vmul.f32 %v1751, %v1766
    %v1769 = vmul.f32 %v1756, %v1766
    %v1770 = vmul.f32 %v1761, %v1766
    %v1771 = vadd.f32 %v1739, %v1767
    %v1772 = vadd.f32 %v1740, %v1768
    %v1773 = vadd.f32 %v1741, %v1769
    %v1774 = vadd.f32 %v1742, %v1770
    %1775 = vst [vmem:[#allocation2] sm:$0xff] %v1771
    %1776 = vst [vmem:[#allocation2 + $0x8] sm:$0xff] %v1772
    %1777 = vst [vmem:[#allocation2 + $0x10] sm:$0xff] %v1773
    %1778 = vst [vmem:[#allocation2 + $0x18] sm:$0xff] %v1774
    %v1779 = vld [vmem:[#allocation2 + $0x1f] sm:$0x1]
    %vm1780 = vcmp.ge.f32.partialorder %v1779, 0.25
    %v1781 = vsel %vm1780, 1, 0
    %v1782 = vcvt.s32.f32 %v1781
    %1783 = vst [vmem:[#allocation8 + $0x1f] sm:$0x1] %v1782
    %v1784 = vld [vmem:[%s3 + $0x1] sm:$0xff]
    %v1785 = vld [vmem:[%s3 + $0x9] sm:$0xff]
    %v1786 = vld [vmem:[%s3 + $0x11] sm:$0xff]
    %v1787 = vld [vmem:[%s3 + $0x19] sm:$0xff]
    %v1788 = vld [vmem:[#allocation2] sm:$0xff]
    %v1789 = vld [vmem:[#allocation2 + $0x8] sm:$0xff]
    %v1790 = vld [vmem:[#allocation2 + $0x10] sm:$0xff]
    %v1791 = vld [vmem:[#allocation2 + $0x18] sm:$0xff]
    %1793 = vset.pattern.permute.xlu0 0
    %1794 = vperm.xlu0 %1793, %v1784
    %v1795 = vpop.permute.xlu0 %1794
    %1798 = vset.pattern.permute.xlu0 0
    %1799 = vperm.xlu0 %1798, %v1785
    %v1800 = vpop.permute.xlu0 %1799
    %1803 = vset.pattern.permute.xlu0 0
    %1804 = vperm.xlu0 %1803, %v1786
    %v1805 = vpop.permute.xlu0 %1804
    %1808 = vset.pattern.permute.xlu0 0
    %1809 = vperm.xlu0 %1808, %v1787
    %v1810 = vpop.permute.xlu0 %1809
    %v1812 = vlaneseq
    %v1813 = vshrl.u32 %v1812, 7
    %v1814 = vsub.s32 0, %v1813
    %v1815 = vrot.slane %v1782, %v1814
    %v1816 = vmul.f32 %v1795, %v1815
    %v1817 = vmul.f32 %v1800, %v1815
    %v1818 = vmul.f32 %v1805, %v1815
    %v1819 = vmul.f32 %v1810, %v1815
    %v1820 = vadd.f32 %v1788, %v1816
    %v1821 = vadd.f32 %v1789, %v1817
    %v1822 = vadd.f32 %v1790, %v1818
    %v1823 = vadd.f32 %v1791, %v1819
    %1824 = vst [vmem:[#allocation2] sm:$0xff] %v1820
    %1825 = vst [vmem:[#allocation2 + $0x8] sm:$0xff] %v1821
    %1826 = vst [vmem:[#allocation2 + $0x10] sm:$0xff] %v1822
    %1827 = vst [vmem:[#allocation2 + $0x18] sm:$0xff] %v1823
    // Predicated region
    $region26: #{tpu_custom_call.1} parent=1 // pred_check
      _
    $region27: #{tpu_custom_call.1} parent=1 // pred_check_branch
      %1829 = sbr.rel (0) target = $region29
    $region28: #{tpu_custom_call.1} parent=1 // pred_region
      %s1831 = ssub.s32 512, 512
      %1832 = vsyncadd [#allocation5], %s1831
      %s1833 = sshll.u32 [#allocation8], 4
      %s1834 = int_to_ptr.vmem [resolvable:$true] %s1833
      %1839 = dma.vmem_to_hbm [thread:$0]  %s1834, 512, %s4, [#allocation5], 128, 128, 8
    $region29: #{tpu_custom_call.1} parent=1 // pred_fallthru
      _
    // Predicated region
    $region30: #{tpu_custom_call.1} parent=1 // pred_check
      _
    $region31: #{tpu_custom_call.1} parent=1 // pred_check_branch
      %1841 = sbr.rel (0) target = $region33
    $region32: #{tpu_custom_call.1} parent=1 // pred_region
      %1842 = dma.done [#allocation5], 512
    $region33: #{tpu_custom_call.1} parent=1 // pred_fallthru
      _
    %1843 = vsyncpa [#allocation4], 1
    %1844 = vsyncpa [#allocation7], 1
    %1845 = vsyncpa [#allocation5], 1

</llo_original>
